<compile_context>
chip_gen: v5e
topology: v5e:2x2
jax: 0.10.0
libtpu: 0.0.40
codegen_flags: <defaults>
</compile_context>

<pallas_src>
import functools

import jax
import jax.numpy as jnp
import numpy as np
from jax import lax
from jax.experimental import pallas as pl
from jax.experimental.pallas import tpu as pltpu


def _mhca_kernel(xq_ref, xkv_ref, wq_ref, wk_ref, wv_ref, wo_ref, bo_ref,
                 out_ref, k_scr, v_scr, *, heads, dim_head, scale):
    """One (batch, q-tile) grid step.

    xq_ref  : (tq, E)    query-token tile
    xkv_ref : (Nkv, E)   key/value tokens for this batch element
    wq_ref  : (E, E)     q projection
    wk_ref  : (E, E)     k projection (first half of to_kv)
    wv_ref  : (E, E)     v projection (second half of to_kv)
    wo_ref  : (E, E)     output projection weight
    bo_ref  : (1, E)     output projection bias
    out_ref : (tq, E)
    k_scr   : (Nkv, E)   persistent K projection (compute dtype)
    v_scr   : (Nkv, E)   persistent V projection (compute dtype)
    """
    cdt = xq_ref.dtype  # native MXU operand dtype (bf16 when caller opts in)

    # (Re)project K/V once per batch element.  The q-tile axis is "arbitrary",
    # so these scratch buffers legally persist across it; this branch only
    # fires on the first q-tile of each batch element.
    @pl.when(pl.program_id(1) == 0)
    def _project_kv():
        xkv = xkv_ref[...]
        k_scr[...] = jnp.dot(xkv, wk_ref[...],
                             preferred_element_type=jnp.float32).astype(cdt)
        v_scr[...] = jnp.dot(xkv, wv_ref[...],
                             preferred_element_type=jnp.float32).astype(cdt)

    # Q projection for this q-tile; the softmax scale is folded into q once.
    q = jnp.dot(xq_ref[...], wq_ref[...], preferred_element_type=jnp.float32)
    q = (q * scale).astype(cdt)                                   # (tq, E)

    tq = q.shape[0]
    emb = heads * dim_head
    acc = jnp.zeros((tq, emb), jnp.float32)                       # f32 accumulator

    # Per-head attention with the output projection folded into the head loop:
    # the narrow (tq, dh) PV result is consumed immediately by the MXU against
    # Wo's row-block, so the only stores this kernel issues (k/v scratch, out)
    # are full E-lane wide.  heads is a small static constant -> unrolled loop.
    for h in range(heads):
        sl = slice(h * dim_head, (h + 1) * dim_head)
        qh = q[:, sl]                                             # (tq, dh)
        kh = k_scr[:, sl]                                         # (Nkv, dh)
        vh = v_scr[:, sl]                                         # (Nkv, dh)

        # QK^T contracting the last dim of both operands (no transpose).
        s = lax.dot_general(qh, kh, (((1,), (1,)), ((), ())),
                            preferred_element_type=jnp.float32)   # (tq, Nkv)
        s = s - jnp.max(s, axis=-1, keepdims=True)
        p = jnp.exp(s)
        p = p * pl.reciprocal(jnp.sum(p, axis=-1, keepdims=True), approx=True)

        pv = jnp.dot(p.astype(cdt), vh,
                     preferred_element_type=jnp.float32)          # (tq, dh)
        acc = acc + jnp.dot(pv.astype(cdt), wo_ref[sl, :],
                            preferred_element_type=jnp.float32)   # (tq, E)

    out_ref[...] = (acc + bo_ref[...]).astype(out_ref.dtype)


def _vmem_budget_bytes(*, tq, nkv, emb, in_itemsize, out_itemsize):
    """Scoped-VMEM budget from the actual block/scratch sizes, capped well
    under the physical per-core VMEM (64 MiB on v7x, 128 MiB on v5e/v6e)."""
    blocks = (
        2 * tq * emb * in_itemsize            # x_q tile (double-buffered)
        + 2 * nkv * emb * in_itemsize         # x_kv block
        + 2 * (4 * emb * emb + emb) * in_itemsize   # w_q, w_k, w_v, w_o, b_o
        + 2 * tq * emb * out_itemsize         # output tile (double-buffered)
        + 2 * nkv * emb * in_itemsize         # k/v scratch
        + 4 * tq * emb * 4 + 2 * tq * nkv * 4  # f32 temporaries (q, acc, s, p)
    )
    try:
        cap = pltpu.get_tpu_info().vmem_capacity_bytes
    except Exception:
        cap = 64 * 1024 * 1024                # conservative: v7x per-core VMEM
    budget = max(32 * 1024 * 1024, 2 * blocks + 8 * 1024 * 1024)
    return int(min(budget, int(0.625 * cap)))  # <= ~40 MiB on v7x, ~80 MiB on v5e/v6e


def multi_head_cross_attention(x_q, x_kv, w_q, w_kv, w_o, b_o, *, heads,
                               q_tile=256, compute_dtype=None,
                               single_buffer_constants=True):
    """x_q: (B, Nq, E), x_kv: (B, Nkv, E). Returns (B, Nq, E) in x_q.dtype.

    compute_dtype: optionally cast activations/weights (e.g. jnp.bfloat16) so
    MXU operands run at bf16 throughput; accumulation stays f32 in-kernel.
    q_tile: query tile size; sweep upward (512+) on v5e/v6e, keep modest on v7x.
    """
    B, Nq, E = x_q.shape
    _, Nkv, _ = x_kv.shape
    assert E % heads == 0
    dim_head = E // heads
    scale = float(dim_head) ** -0.5
    out_dtype = x_q.dtype

    if compute_dtype is not None:
        x_q = x_q.astype(compute_dtype)
        x_kv = x_kv.astype(compute_dtype)
        w_q, w_kv, w_o, b_o = (t.astype(compute_dtype)
                               for t in (w_q, w_kv, w_o, b_o))
    cdt = x_q.dtype

    # Split the fused KV weight so the (Nkv, 2E) intermediate never exists.
    w_k = w_kv[:, :E]
    w_v = w_kv[:, E:]
    b_o2 = b_o.reshape(1, E)

    tq = int(min(Nq, q_tile))
    num_q_tiles = pl.cdiv(Nq, tq)

    kernel = functools.partial(_mhca_kernel, heads=heads, dim_head=dim_head,
                               scale=scale)
    vmem_budget = _vmem_budget_bytes(tq=tq, nkv=Nkv, emb=E,
                                     in_itemsize=jnp.dtype(cdt).itemsize,
                                     out_itemsize=jnp.dtype(out_dtype).itemsize)

    def build(single_buffer):
        # Constant-index operands (weights/bias) never change their block, and
        # x_kv only changes when the batch index changes -> single-buffer them
        # to free VMEM (default double-buffering wastes a full copy each).
        if single_buffer:
            def const_spec(shape, index_map):
                return pl.BlockSpec(shape, index_map,
                                    pipeline_mode=pl.Buffered(1))
        else:
            def const_spec(shape, index_map):
                return pl.BlockSpec(shape, index_map)

        in_specs = [
            pl.BlockSpec((None, tq, E), lambda b, i: (b, i, 0)),          # x_q
            const_spec((None, Nkv, E), lambda b, i: (b, 0, 0)),           # x_kv
            const_spec((E, E), lambda b, i: (0, 0)),                      # w_q
            const_spec((E, E), lambda b, i: (0, 0)),                      # w_k
            const_spec((E, E), lambda b, i: (0, 0)),                      # w_v
            const_spec((E, E), lambda b, i: (0, 0)),                      # w_o
            const_spec((1, E), lambda b, i: (0, 0)),                      # b_o
        ]
        return pl.pallas_call(
            kernel,
            out_shape=jax.ShapeDtypeStruct((B, Nq, E), out_dtype),
            grid_spec=pltpu.PrefetchScalarGridSpec(
                num_scalar_prefetch=0,
                grid=(B, num_q_tiles),
                in_specs=in_specs,
                out_specs=pl.BlockSpec((None, tq, E), lambda b, i: (b, i, 0)),
                scratch_shapes=[pltpu.VMEM((Nkv, E), cdt),   # K projection
                                pltpu.VMEM((Nkv, E), cdt)],  # V projection
            ),
            compiler_params=pltpu.CompilerParams(
                # Batch axis parallel (megacore); q-tile axis arbitrary so the
                # persistent K/V scratch is legal across it.
                dimension_semantics=("parallel", "arbitrary"),
                vmem_limit_bytes=vmem_budget,
            ),
        )

    args = (x_q, x_kv, w_q, w_k, w_v, w_o, b_o2)
    if single_buffer_constants:
        try:
            return jax.block_until_ready(build(True)(*args))
        except Exception:
            # pipeline_mode / Buffered(1) not supported by this Pallas build —
            # fall back to default double-buffering (correct, slightly more VMEM).
            pass
    return jax.block_until_ready(build(False)(*args))


def _reference(x_q, x_kv, w_q, w_kv, w_o, b_o, *, heads):
    """Pure-JAX reference replicating the PyTorch default forward."""
    B, Nq, E = x_q.shape
    dh = E // heads
    scale = float(dh) ** -0.5

    q = x_q @ w_q                                   # (B, Nq, E)
    kv = x_kv @ w_kv                                # (B, Nkv, 2E)
    k, v = kv[..., :E], kv[..., E:]

    def split_heads(t):
        b, n, _ = t.shape
        return t.reshape(b, n, heads, dh).transpose(0, 2, 1, 3)  # (B, H, N, dh)

    qh, kh, vh = split_heads(q), split_heads(k), split_heads(v)
    qk = jnp.einsum("bhqd,bhkd->bhqk", qh, kh) * scale
    attn = jax.nn.softmax(qk, axis=-1)
    out = jnp.einsum("bhqk,bhkd->bhqd", attn, vh)
    out = out.transpose(0, 2, 1, 3).reshape(B, Nq, E)
    return out @ w_o + b_o


if __name__ == "__main__":
    # Small shapes; Nq=32 with q_tile=16 gives 2 q-tiles per batch element so
    # the persistent-KV (@pl.when(i == 0)) path is actually exercised.
    B, Nq, Nkv, E, H = 2, 32, 16, 32, 4

    key = jax.random.PRNGKey(0)
    k1, k2, k3, k4, k5, k6 = jax.random.split(key, 6)

    x_q = jax.random.normal(k1, (B, Nq, E), dtype=jnp.float32)
    x_kv = jax.random.normal(k2, (B, Nkv, E), dtype=jnp.float32)

    # Synthetic parameters, stored as (in_features, out_features) so the
    # projection is x @ W (equivalent to nn.Linear's x @ W.T layout).
    w_q = jax.random.normal(k3, (E, E), dtype=jnp.float32) * 0.1
    w_kv = jax.random.normal(k4, (E, 2 * E), dtype=jnp.float32) * 0.1
    w_o = jax.random.normal(k5, (E, E), dtype=jnp.float32) * 0.1
    b_o = jax.random.normal(k6, (E,), dtype=jnp.float32) * 0.1

    ref = _reference(x_q, x_kv, w_q, w_kv, w_o, b_o, heads=H)

    # f32 compute path (tolerance loosened only for the approx EUP reciprocal).
    out = multi_head_cross_attention(x_q, x_kv, w_q, w_kv, w_o, b_o,
                                     heads=H, q_tile=16)
    out = jax.block_until_ready(out)
    np.testing.assert_allclose(np.asarray(out), np.asarray(ref),
                               rtol=2e-3, atol=2e-3)

    # bf16-operand / f32-accumulate path (recommended dtype on all generations).
    out_bf16 = multi_head_cross_attention(x_q, x_kv, w_q, w_kv, w_o, b_o,
                                          heads=H, q_tile=16,
                                          compute_dtype=jnp.bfloat16)
    out_bf16 = jax.block_until_ready(out_bf16)
    np.testing.assert_allclose(np.asarray(out_bf16), np.asarray(ref),
                               rtol=1e-1, atol=5e-2)

    print("KERNEL_OK")
</pallas_src>

<mosaic_0001>
module attributes {stable_mosaic.version = 11 : i64} {
  func.func @_mhca_kernel(%arg0: i32, %arg1: i32, %arg2: memref<1x16x32xf32, #tpu.memory_space<vmem>>, %arg3: memref<1x16x32xf32, #tpu.memory_space<vmem>>, %arg4: memref<32x32xf32, #tpu.memory_space<vmem>>, %arg5: memref<32x32xf32, #tpu.memory_space<vmem>>, %arg6: memref<32x32xf32, #tpu.memory_space<vmem>>, %arg7: memref<32x32xf32, #tpu.memory_space<vmem>>, %arg8: memref<1x32xf32, #tpu.memory_space<vmem>>, %arg9: memref<1x16x32xf32, #tpu.memory_space<vmem>>, %arg10: memref<16x32xf32, #tpu.memory_space<vmem>>, %arg11: memref<16x32xf32, #tpu.memory_space<vmem>>) attributes {dimension_semantics = [#tpu.dimension_semantics<parallel>, #tpu.dimension_semantics<arbitrary>], iteration_bounds = array<i64: 2, 2>, scalar_prefetch = 0 : i64, scratch_operands = 2 : i64, tpu.core_type = #tpu.core_type<tc>, window_params = [{transform_indices = @transform_0, window_bounds = array<i64: 1, 16, 32>}, {pipeline_mode = #tpu.pipeline_mode<synchronous>, transform_indices = @transform_1, window_bounds = array<i64: 1, 16, 32>}, {pipeline_mode = #tpu.pipeline_mode<synchronous>, transform_indices = @transform_2, window_bounds = array<i64: 32, 32>}, {pipeline_mode = #tpu.pipeline_mode<synchronous>, transform_indices = @transform_3, window_bounds = array<i64: 32, 32>}, {pipeline_mode = #tpu.pipeline_mode<synchronous>, transform_indices = @transform_4, window_bounds = array<i64: 32, 32>}, {pipeline_mode = #tpu.pipeline_mode<synchronous>, transform_indices = @transform_5, window_bounds = array<i64: 32, 32>}, {pipeline_mode = #tpu.pipeline_mode<synchronous>, transform_indices = @transform_6, window_bounds = array<i64: 1, 32>}, {transform_indices = @transform_7, window_bounds = array<i64: 1, 16, 32>}]} {
    %c0_i32 = arith.constant 0 : i32
    %0 = arith.cmpi eq, %arg1, %c0_i32 : i32
    %1 = arith.extui %0 : i1 to i32
    %c0_i32_0 = arith.constant 0 : i32
    %2 = arith.cmpi ne, %1, %c0_i32_0 : i32
    scf.if %2 {
      %c0_53 = arith.constant 0 : index
      %c0_54 = arith.constant 0 : index
      %c0_55 = arith.constant 0 : index
      %88 = vector.load %arg3[%c0_53, %c0_54, %c0_55] : memref<1x16x32xf32, #tpu.memory_space<vmem>>, vector<1x16x32xf32>
      %89 = vector.shape_cast %88 : vector<1x16x32xf32> to vector<16x32xf32>
      %c0_56 = arith.constant 0 : index
      %c0_57 = arith.constant 0 : index
      %90 = vector.load %arg5[%c0_56, %c0_57] : memref<32x32xf32, #tpu.memory_space<vmem>>, vector<32x32xf32>
      %cst_58 = arith.constant dense<0.000000e+00> : vector<16x32xf32>
      %91 = tpu.matmul %89, %90, %cst_58 {dimension_numbers = #tpu.dot_dimension_numbers<[1], [0], [0], [1], [0, 0, 1, 1], [], []>} : vector<16x32xf32>, vector<32x32xf32>, vector<16x32xf32> -> vector<16x32xf32>
      %c0_59 = arith.constant 0 : index
      %c0_60 = arith.constant 0 : index
      %92 = vector.load %arg10[%c0_59, %c0_60] : memref<16x32xf32, #tpu.memory_space<vmem>>, vector<16x32xf32>
      tpu.vector_store %arg10[%c0_59, %c0_60], %91 {strides = array<i32>} : memref<16x32xf32, #tpu.memory_space<vmem>>, vector<16x32xf32>,
      %c0_61 = arith.constant 0 : index
      %c0_62 = arith.constant 0 : index
      %93 = vector.load %arg6[%c0_61, %c0_62] : memref<32x32xf32, #tpu.memory_space<vmem>>, vector<32x32xf32>
      %cst_63 = arith.constant dense<0.000000e+00> : vector<16x32xf32>
      %94 = tpu.matmul %89, %93, %cst_63 {dimension_numbers = #tpu.dot_dimension_numbers<[1], [0], [0], [1], [0, 0, 1, 1], [], []>} : vector<16x32xf32>, vector<32x32xf32>, vector<16x32xf32> -> vector<16x32xf32>
      %c0_64 = arith.constant 0 : index
      %c0_65 = arith.constant 0 : index
      %95 = vector.load %arg11[%c0_64, %c0_65] : memref<16x32xf32, #tpu.memory_space<vmem>>, vector<16x32xf32>
      tpu.vector_store %arg11[%c0_64, %c0_65], %94 {strides = array<i32>} : memref<16x32xf32, #tpu.memory_space<vmem>>, vector<16x32xf32>,
    } else {
    }
    %c0 = arith.constant 0 : index
    %c0_1 = arith.constant 0 : index
    %c0_2 = arith.constant 0 : index
    %3 = vector.load %arg2[%c0, %c0_1, %c0_2] : memref<1x16x32xf32, #tpu.memory_space<vmem>>, vector<1x16x32xf32>
    %4 = vector.shape_cast %3 : vector<1x16x32xf32> to vector<16x32xf32>
    %c0_3 = arith.constant 0 : index
    %c0_4 = arith.constant 0 : index
    %5 = vector.load %arg4[%c0_3, %c0_4] : memref<32x32xf32, #tpu.memory_space<vmem>>, vector<32x32xf32>
    %cst = arith.constant dense<0.000000e+00> : vector<16x32xf32>
    %6 = tpu.matmul %4, %5, %cst {dimension_numbers = #tpu.dot_dimension_numbers<[1], [0], [0], [1], [0, 0, 1, 1], [], []>} : vector<16x32xf32>, vector<32x32xf32>, vector<16x32xf32> -> vector<16x32xf32>
    %cst_5 = arith.constant 0.353553385 : f32
    %7 = vector.broadcast %cst_5 : f32 to vector<16x32xf32>
    %8 = arith.mulf %6, %7 : vector<16x32xf32>
    %cst_6 = arith.constant 0.000000e+00 : f32
    %9 = vector.broadcast %cst_6 : f32 to vector<16x32xf32>
    %10 = vector.extract_strided_slice %8 {offsets = [0, 0], sizes = [16, 8], strides = [1, 1]} : vector<16x32xf32> to vector<16x8xf32>
    %c0_7 = arith.constant 0 : index
    %c0_8 = arith.constant 0 : index
    %11 = vector.load %arg10[%c0_7, %c0_8] : memref<16x32xf32, #tpu.memory_space<vmem>>, vector<16x8xf32>
    %c0_9 = arith.constant 0 : index
    %c0_10 = arith.constant 0 : index
    %12 = vector.load %arg11[%c0_9, %c0_10] : memref<16x32xf32, #tpu.memory_space<vmem>>, vector<16x8xf32>
    %cst_11 = arith.constant dense<0.000000e+00> : vector<16x16xf32>
    %13 = tpu.matmul %10, %11, %cst_11 {dimension_numbers = #tpu.dot_dimension_numbers<[1], [1], [0], [0], [0, 0, 1, 0], [], []>} : vector<16x8xf32>, vector<16x8xf32>, vector<16x16xf32> -> vector<16x16xf32>
    %cst_12 = arith.constant dense<0xFF800000> : vector<16xf32>
    %14 = vector.multi_reduction <maximumf>, %13, %cst_12 [1] : vector<16x16xf32> to vector<16xf32>
    %15 = vector.shape_cast %14 : vector<16xf32> to vector<16x1xf32>
    %16 = vector.broadcast %15 : vector<16x1xf32> to vector<16x16xf32>
    %17 = arith.subf %13, %16 : vector<16x16xf32>
    %18 = math.exp %17 : vector<16x16xf32>
    %cst_13 = arith.constant dense<0.000000e+00> : vector<16xf32>
    %19 = vector.multi_reduction <add>, %18, %cst_13 [1] : vector<16x16xf32> to vector<16xf32>
    %20 = vector.shape_cast %19 : vector<16xf32> to vector<16x1xf32>
    %21 = tpu.reciprocal %20 {approx = true} : vector<16x1xf32> -> vector<16x1xf32>
    %22 = vector.broadcast %21 : vector<16x1xf32> to vector<16x16xf32>
    %23 = arith.mulf %18, %22 : vector<16x16xf32>
    %cst_14 = arith.constant dense<0.000000e+00> : vector<16x8xf32>
    %24 = tpu.matmul %23, %12, %cst_14 {dimension_numbers = #tpu.dot_dimension_numbers<[1], [0], [0], [1], [0, 0, 1, 1], [], []>} : vector<16x16xf32>, vector<16x8xf32>, vector<16x8xf32> -> vector<16x8xf32>
    %c0_15 = arith.constant 0 : index
    %c0_16 = arith.constant 0 : index
    %25 = vector.load %arg7[%c0_15, %c0_16] : memref<32x32xf32, #tpu.memory_space<vmem>>, vector<8x32xf32>
    %cst_17 = arith.constant dense<0.000000e+00> : vector<16x32xf32>
    %26 = tpu.matmul %24, %25, %cst_17 {dimension_numbers = #tpu.dot_dimension_numbers<[1], [0], [0], [1], [0, 0, 1, 1], [], []>} : vector<16x8xf32>, vector<8x32xf32>, vector<16x32xf32> -> vector<16x32xf32>
    %27 = arith.addf %9, %26 : vector<16x32xf32>
    %28 = vector.extract_strided_slice %8 {offsets = [0, 8], sizes = [16, 8], strides = [1, 1]} : vector<16x32xf32> to vector<16x8xf32>
    %c0_18 = arith.constant 0 : index
    %c8 = arith.constant 8 : index
    %29 = vector.load %arg10[%c0_18, %c8] : memref<16x32xf32, #tpu.memory_space<vmem>>, vector<16x8xf32>
    %c0_19 = arith.constant 0 : index
    %c8_20 = arith.constant 8 : index
    %30 = vector.load %arg11[%c0_19, %c8_20] : memref<16x32xf32, #tpu.memory_space<vmem>>, vector<16x8xf32>
    %cst_21 = arith.constant dense<0.000000e+00> : vector<16x16xf32>
    %31 = tpu.matmul %28, %29, %cst_21 {dimension_numbers = #tpu.dot_dimension_numbers<[1], [1], [0], [0], [0, 0, 1, 0], [], []>} : vector<16x8xf32>, vector<16x8xf32>, vector<16x16xf32> -> vector<16x16xf32>
    %cst_22 = arith.constant dense<0xFF800000> : vector<16xf32>
    %32 = vector.multi_reduction <maximumf>, %31, %cst_22 [1] : vector<16x16xf32> to vector<16xf32>
    %33 = vector.shape_cast %32 : vector<16xf32> to vector<16x1xf32>
    %34 = vector.broadcast %33 : vector<16x1xf32> to vector<16x16xf32>
    %35 = arith.subf %31, %34 : vector<16x16xf32>
    %36 = math.exp %35 : vector<16x16xf32>
    %cst_23 = arith.constant dense<0.000000e+00> : vector<16xf32>
    %37 = vector.multi_reduction <add>, %36, %cst_23 [1] : vector<16x16xf32> to vector<16xf32>
    %38 = vector.shape_cast %37 : vector<16xf32> to vector<16x1xf32>
    %39 = tpu.reciprocal %38 {approx = true} : vector<16x1xf32> -> vector<16x1xf32>
    %40 = vector.broadcast %39 : vector<16x1xf32> to vector<16x16xf32>
    %41 = arith.mulf %36, %40 : vector<16x16xf32>
    %cst_24 = arith.constant dense<0.000000e+00> : vector<16x8xf32>
    %42 = tpu.matmul %41, %30, %cst_24 {dimension_numbers = #tpu.dot_dimension_numbers<[1], [0], [0], [1], [0, 0, 1, 1], [], []>} : vector<16x16xf32>, vector<16x8xf32>, vector<16x8xf32> -> vector<16x8xf32>
    %c8_25 = arith.constant 8 : index
    %c0_26 = arith.constant 0 : index
    %43 = vector.load %arg7[%c8_25, %c0_26] : memref<32x32xf32, #tpu.memory_space<vmem>>, vector<8x32xf32>
    %cst_27 = arith.constant dense<0.000000e+00> : vector<16x32xf32>
    %44 = tpu.matmul %42, %43, %cst_27 {dimension_numbers = #tpu.dot_dimension_numbers<[1], [0], [0], [1], [0, 0, 1, 1], [], []>} : vector<16x8xf32>, vector<8x32xf32>, vector<16x32xf32> -> vector<16x32xf32>
    %45 = arith.addf %27, %44 : vector<16x32xf32>
    %46 = vector.extract_strided_slice %8 {offsets = [0, 16], sizes = [16, 8], strides = [1, 1]} : vector<16x32xf32> to vector<16x8xf32>
    %c0_28 = arith.constant 0 : index
    %c16 = arith.constant 16 : index
    %47 = vector.load %arg10[%c0_28, %c16] : memref<16x32xf32, #tpu.memory_space<vmem>>, vector<16x8xf32>
    %c0_29 = arith.constant 0 : index
    %c16_30 = arith.constant 16 : index
    %48 = vector.load %arg11[%c0_29, %c16_30] : memref<16x32xf32, #tpu.memory_space<vmem>>, vector<16x8xf32>
    %cst_31 = arith.constant dense<0.000000e+00> : vector<16x16xf32>
    %49 = tpu.matmul %46, %47, %cst_31 {dimension_numbers = #tpu.dot_dimension_numbers<[1], [1], [0], [0], [0, 0, 1, 0], [], []>} : vector<16x8xf32>, vector<16x8xf32>, vector<16x16xf32> -> vector<16x16xf32>
    %cst_32 = arith.constant dense<0xFF800000> : vector<16xf32>
    %50 = vector.multi_reduction <maximumf>, %49, %cst_32 [1] : vector<16x16xf32> to vector<16xf32>
    %51 = vector.shape_cast %50 : vector<16xf32> to vector<16x1xf32>
    %52 = vector.broadcast %51 : vector<16x1xf32> to vector<16x16xf32>
    %53 = arith.subf %49, %52 : vector<16x16xf32>
    %54 = math.exp %53 : vector<16x16xf32>
    %cst_33 = arith.constant dense<0.000000e+00> : vector<16xf32>
    %55 = vector.multi_reduction <add>, %54, %cst_33 [1] : vector<16x16xf32> to vector<16xf32>
    %56 = vector.shape_cast %55 : vector<16xf32> to vector<16x1xf32>
    %57 = tpu.reciprocal %56 {approx = true} : vector<16x1xf32> -> vector<16x1xf32>
    %58 = vector.broadcast %57 : vector<16x1xf32> to vector<16x16xf32>
    %59 = arith.mulf %54, %58 : vector<16x16xf32>
    %cst_34 = arith.constant dense<0.000000e+00> : vector<16x8xf32>
    %60 = tpu.matmul %59, %48, %cst_34 {dimension_numbers = #tpu.dot_dimension_numbers<[1], [0], [0], [1], [0, 0, 1, 1], [], []>} : vector<16x16xf32>, vector<16x8xf32>, vector<16x8xf32> -> vector<16x8xf32>
    %c16_35 = arith.constant 16 : index
    %c0_36 = arith.constant 0 : index
    %61 = vector.load %arg7[%c16_35, %c0_36] : memref<32x32xf32, #tpu.memory_space<vmem>>, vector<8x32xf32>
    %cst_37 = arith.constant dense<0.000000e+00> : vector<16x32xf32>
    %62 = tpu.matmul %60, %61, %cst_37 {dimension_numbers = #tpu.dot_dimension_numbers<[1], [0], [0], [1], [0, 0, 1, 1], [], []>} : vector<16x8xf32>, vector<8x32xf32>, vector<16x32xf32> -> vector<16x32xf32>
    %63 = arith.addf %45, %62 : vector<16x32xf32>
    %64 = vector.extract_strided_slice %8 {offsets = [0, 24], sizes = [16, 8], strides = [1, 1]} : vector<16x32xf32> to vector<16x8xf32>
    %c0_38 = arith.constant 0 : index
    %c24 = arith.constant 24 : index
    %65 = vector.load %arg10[%c0_38, %c24] : memref<16x32xf32, #tpu.memory_space<vmem>>, vector<16x8xf32>
    %c0_39 = arith.constant 0 : index
    %c24_40 = arith.constant 24 : index
    %66 = vector.load %arg11[%c0_39, %c24_40] : memref<16x32xf32, #tpu.memory_space<vmem>>, vector<16x8xf32>
    %cst_41 = arith.constant dense<0.000000e+00> : vector<16x16xf32>
    %67 = tpu.matmul %64, %65, %cst_41 {dimension_numbers = #tpu.dot_dimension_numbers<[1], [1], [0], [0], [0, 0, 1, 0], [], []>} : vector<16x8xf32>, vector<16x8xf32>, vector<16x16xf32> -> vector<16x16xf32>
    %cst_42 = arith.constant dense<0xFF800000> : vector<16xf32>
    %68 = vector.multi_reduction <maximumf>, %67, %cst_42 [1] : vector<16x16xf32> to vector<16xf32>
    %69 = vector.shape_cast %68 : vector<16xf32> to vector<16x1xf32>
    %70 = vector.broadcast %69 : vector<16x1xf32> to vector<16x16xf32>
    %71 = arith.subf %67, %70 : vector<16x16xf32>
    %72 = math.exp %71 : vector<16x16xf32>
    %cst_43 = arith.constant dense<0.000000e+00> : vector<16xf32>
    %73 = vector.multi_reduction <add>, %72, %cst_43 [1] : vector<16x16xf32> to vector<16xf32>
    %74 = vector.shape_cast %73 : vector<16xf32> to vector<16x1xf32>
    %75 = tpu.reciprocal %74 {approx = true} : vector<16x1xf32> -> vector<16x1xf32>
    %76 = vector.broadcast %75 : vector<16x1xf32> to vector<16x16xf32>
    %77 = arith.mulf %72, %76 : vector<16x16xf32>
    %cst_44 = arith.constant dense<0.000000e+00> : vector<16x8xf32>
    %78 = tpu.matmul %77, %66, %cst_44 {dimension_numbers = #tpu.dot_dimension_numbers<[1], [0], [0], [1], [0, 0, 1, 1], [], []>} : vector<16x16xf32>, vector<16x8xf32>, vector<16x8xf32> -> vector<16x8xf32>
    %c24_45 = arith.constant 24 : index
    %c0_46 = arith.constant 0 : index
    %79 = vector.load %arg7[%c24_45, %c0_46] : memref<32x32xf32, #tpu.memory_space<vmem>>, vector<8x32xf32>
    %cst_47 = arith.constant dense<0.000000e+00> : vector<16x32xf32>
    %80 = tpu.matmul %78, %79, %cst_47 {dimension_numbers = #tpu.dot_dimension_numbers<[1], [0], [0], [1], [0, 0, 1, 1], [], []>} : vector<16x8xf32>, vector<8x32xf32>, vector<16x32xf32> -> vector<16x32xf32>
    %81 = arith.addf %63, %80 : vector<16x32xf32>
    %c0_48 = arith.constant 0 : index
    %c0_49 = arith.constant 0 : index
    %82 = vector.load %arg8[%c0_48, %c0_49] : memref<1x32xf32, #tpu.memory_space<vmem>>, vector<1x32xf32>
    %83 = vector.broadcast %82 : vector<1x32xf32> to vector<16x32xf32>
    %84 = arith.addf %81, %83 : vector<16x32xf32>
    %c0_50 = arith.constant 0 : index
    %c0_51 = arith.constant 0 : index
    %c0_52 = arith.constant 0 : index
    %85 = vector.load %arg9[%c0_50, %c0_51, %c0_52] : memref<1x16x32xf32, #tpu.memory_space<vmem>>, vector<1x16x32xf32>
    %86 = vector.shape_cast %85 : vector<1x16x32xf32> to vector<16x32xf32>
    %87 = vector.shape_cast %84 : vector<16x32xf32> to vector<1x16x32xf32>
    tpu.vector_store %arg9[%c0_50, %c0_51, %c0_52], %87 {strides = array<i32>} : memref<1x16x32xf32, #tpu.memory_space<vmem>>, vector<1x16x32xf32>,
    return
  }
  func.func @transform_0(%arg0: i32, %arg1: i32) -> (i32, i32, i32) {
    %c0_i32 = arith.constant 0 : i32
    %c0_i32_0 = arith.constant 0 : i32
    return %arg0, %arg1, %c0_i32 : i32, i32, i32
  }
  func.func @transform_1(%arg0: i32, %arg1: i32) -> (i32, i32, i32) {
    %c0_i32 = arith.constant 0 : i32
    %c0_i32_0 = arith.constant 0 : i32
    %c0_i32_1 = arith.constant 0 : i32
    return %arg0, %c0_i32, %c0_i32_0 : i32, i32, i32
  }
  func.func @transform_2(%arg0: i32, %arg1: i32) -> (i32, i32) {
    %c0_i32 = arith.constant 0 : i32
    %c0_i32_0 = arith.constant 0 : i32
    %c0_i32_1 = arith.constant 0 : i32
    return %c0_i32, %c0_i32_0 : i32, i32
  }
  func.func @transform_3(%arg0: i32, %arg1: i32) -> (i32, i32) {
    %c0_i32 = arith.constant 0 : i32
    %c0_i32_0 = arith.constant 0 : i32
    %c0_i32_1 = arith.constant 0 : i32
    return %c0_i32, %c0_i32_0 : i32, i32
  }
  func.func @transform_4(%arg0: i32, %arg1: i32) -> (i32, i32) {
    %c0_i32 = arith.constant 0 : i32
    %c0_i32_0 = arith.constant 0 : i32
    %c0_i32_1 = arith.constant 0 : i32
    return %c0_i32, %c0_i32_0 : i32, i32
  }
  func.func @transform_5(%arg0: i32, %arg1: i32) -> (i32, i32) {
    %c0_i32 = arith.constant 0 : i32
    %c0_i32_0 = arith.constant 0 : i32
    %c0_i32_1 = arith.constant 0 : i32
    return %c0_i32, %c0_i32_0 : i32, i32
  }
  func.func @transform_6(%arg0: i32, %arg1: i32) -> (i32, i32) {
    %c0_i32 = arith.constant 0 : i32
    %c0_i32_0 = arith.constant 0 : i32
    %c0_i32_1 = arith.constant 0 : i32
    return %c0_i32, %c0_i32_0 : i32, i32
  }
  func.func @transform_7(%arg0: i32, %arg1: i32) -> (i32, i32, i32) {
    %c0_i32 = arith.constant 0 : i32
    %c0_i32_0 = arith.constant 0 : i32
    return %arg0, %arg1, %c0_i32 : i32, i32, i32
  }
}

module attributes {stable_mosaic.version = 11 : i64} {
  func.func @_mhca_kernel(%arg0: i32, %arg1: i32, %arg2: memref<1x16x32xf32, #tpu.memory_space<vmem>>, %arg3: memref<1x16x32xf32, #tpu.memory_space<vmem>>, %arg4: memref<32x32xf32, #tpu.memory_space<vmem>>, %arg5: memref<32x32xf32, #tpu.memory_space<vmem>>, %arg6: memref<32x32xf32, #tpu.memory_space<vmem>>, %arg7: memref<32x32xf32, #tpu.memory_space<vmem>>, %arg8: memref<1x32xf32, #tpu.memory_space<vmem>>, %arg9: memref<1x16x32xf32, #tpu.memory_space<vmem>>, %arg10: memref<16x32xf32, #tpu.memory_space<vmem>>, %arg11: memref<16x32xf32, #tpu.memory_space<vmem>>) attributes {dimension_semantics = [#tpu.dimension_semantics<parallel>, #tpu.dimension_semantics<arbitrary>], iteration_bounds = array<i64: 2, 2>, scalar_prefetch = 0 : i64, scratch_operands = 2 : i64, tpu.core_type = #tpu.core_type<tc>, window_params = [{transform_indices = @transform_0, window_bounds = array<i64: 1, 16, 32>}, {transform_indices = @transform_1, window_bounds = array<i64: 1, 16, 32>}, {pipeline_mode = #tpu.pipeline_mode<synchronous>, transform_indices = @transform_2, window_bounds = array<i64: 32, 32>}, {pipeline_mode = #tpu.pipeline_mode<synchronous>, transform_indices = @transform_3, window_bounds = array<i64: 32, 32>}, {pipeline_mode = #tpu.pipeline_mode<synchronous>, transform_indices = @transform_4, window_bounds = array<i64: 32, 32>}, {pipeline_mode = #tpu.pipeline_mode<synchronous>, transform_indices = @transform_5, window_bounds = array<i64: 32, 32>}, {pipeline_mode = #tpu.pipeline_mode<synchronous>, transform_indices = @transform_6, window_bounds = array<i64: 1, 32>}, {transform_indices = @transform_7, window_bounds = array<i64: 1, 16, 32>}]} {
    %c0_i32 = arith.constant 0 : i32
    %0 = arith.cmpi eq, %arg1, %c0_i32 : i32
    %1 = arith.extui %0 : i1 to i32
    %c0_i32_0 = arith.constant 0 : i32
    %2 = arith.cmpi ne, %1, %c0_i32_0 : i32
    scf.if %2 {
      %c0_53 = arith.constant 0 : index
      %c0_54 = arith.constant 0 : index
      %c0_55 = arith.constant 0 : index
      %88 = vector.load %arg3[%c0_53, %c0_54, %c0_55] : memref<1x16x32xf32, #tpu.memory_space<vmem>>, vector<1x16x32xf32>
      %89 = vector.shape_cast %88 : vector<1x16x32xf32> to vector<16x32xf32>
      %c0_56 = arith.constant 0 : index
      %c0_57 = arith.constant 0 : index
      %90 = vector.load %arg5[%c0_56, %c0_57] : memref<32x32xf32, #tpu.memory_space<vmem>>, vector<32x32xf32>
      %cst_58 = arith.constant dense<0.000000e+00> : vector<16x32xf32>
      %91 = tpu.matmul %89, %90, %cst_58 {dimension_numbers = #tpu.dot_dimension_numbers<[1], [0], [0], [1], [0, 0, 1, 1], [], []>} : vector<16x32xf32>, vector<32x32xf32>, vector<16x32xf32> -> vector<16x32xf32>
      %c0_59 = arith.constant 0 : index
      %c0_60 = arith.constant 0 : index
      %92 = vector.load %arg10[%c0_59, %c0_60] : memref<16x32xf32, #tpu.memory_space<vmem>>, vector<16x32xf32>
      tpu.vector_store %arg10[%c0_59, %c0_60], %91 {strides = array<i32>} : memref<16x32xf32, #tpu.memory_space<vmem>>, vector<16x32xf32>,
      %c0_61 = arith.constant 0 : index
      %c0_62 = arith.constant 0 : index
      %93 = vector.load %arg6[%c0_61, %c0_62] : memref<32x32xf32, #tpu.memory_space<vmem>>, vector<32x32xf32>
      %cst_63 = arith.constant dense<0.000000e+00> : vector<16x32xf32>
      %94 = tpu.matmul %89, %93, %cst_63 {dimension_numbers = #tpu.dot_dimension_numbers<[1], [0], [0], [1], [0, 0, 1, 1], [], []>} : vector<16x32xf32>, vector<32x32xf32>, vector<16x32xf32> -> vector<16x32xf32>
      %c0_64 = arith.constant 0 : index
      %c0_65 = arith.constant 0 : index
      %95 = vector.load %arg11[%c0_64, %c0_65] : memref<16x32xf32, #tpu.memory_space<vmem>>, vector<16x32xf32>
      tpu.vector_store %arg11[%c0_64, %c0_65], %94 {strides = array<i32>} : memref<16x32xf32, #tpu.memory_space<vmem>>, vector<16x32xf32>,
    } else {
    }
    %c0 = arith.constant 0 : index
    %c0_1 = arith.constant 0 : index
    %c0_2 = arith.constant 0 : index
    %3 = vector.load %arg2[%c0, %c0_1, %c0_2] : memref<1x16x32xf32, #tpu.memory_space<vmem>>, vector<1x16x32xf32>
    %4 = vector.shape_cast %3 : vector<1x16x32xf32> to vector<16x32xf32>
    %c0_3 = arith.constant 0 : index
    %c0_4 = arith.constant 0 : index
    %5 = vector.load %arg4[%c0_3, %c0_4] : memref<32x32xf32, #tpu.memory_space<vmem>>, vector<32x32xf32>
    %cst = arith.constant dense<0.000000e+00> : vector<16x32xf32>
    %6 = tpu.matmul %4, %5, %cst {dimension_numbers = #tpu.dot_dimension_numbers<[1], [0], [0], [1], [0, 0, 1, 1], [], []>} : vector<16x32xf32>, vector<32x32xf32>, vector<16x32xf32> -> vector<16x32xf32>
    %cst_5 = arith.constant 0.353553385 : f32
    %7 = vector.broadcast %cst_5 : f32 to vector<16x32xf32>
    %8 = arith.mulf %6, %7 : vector<16x32xf32>
    %cst_6 = arith.constant 0.000000e+00 : f32
    %9 = vector.broadcast %cst_6 : f32 to vector<16x32xf32>
    %10 = vector.extract_strided_slice %8 {offsets = [0, 0], sizes = [16, 8], strides = [1, 1]} : vector<16x32xf32> to vector<16x8xf32>
    %c0_7 = arith.constant 0 : index
    %c0_8 = arith.constant 0 : index
    %11 = vector.load %arg10[%c0_7, %c0_8] : memref<16x32xf32, #tpu.memory_space<vmem>>, vector<16x8xf32>
    %c0_9 = arith.constant 0 : index
    %c0_10 = arith.constant 0 : index
    %12 = vector.load %arg11[%c0_9, %c0_10] : memref<16x32xf32, #tpu.memory_space<vmem>>, vector<16x8xf32>
    %cst_11 = arith.constant dense<0.000000e+00> : vector<16x16xf32>
    %13 = tpu.matmul %10, %11, %cst_11 {dimension_numbers = #tpu.dot_dimension_numbers<[1], [1], [0], [0], [0, 0, 1, 0], [], []>} : vector<16x8xf32>, vector<16x8xf32>, vector<16x16xf32> -> vector<16x16xf32>
    %cst_12 = arith.constant dense<0xFF800000> : vector<16xf32>
    %14 = vector.multi_reduction <maximumf>, %13, %cst_12 [1] : vector<16x16xf32> to vector<16xf32>
    %15 = vector.shape_cast %14 : vector<16xf32> to vector<16x1xf32>
    %16 = vector.broadcast %15 : vector<16x1xf32> to vector<16x16xf32>
    %17 = arith.subf %13, %16 : vector<16x16xf32>
    %18 = math.exp %17 : vector<16x16xf32>
    %cst_13 = arith.constant dense<0.000000e+00> : vector<16xf32>
    %19 = vector.multi_reduction <add>, %18, %cst_13 [1] : vector<16x16xf32> to vector<16xf32>
    %20 = vector.shape_cast %19 : vector<16xf32> to vector<16x1xf32>
    %21 = tpu.reciprocal %20 {approx = true} : vector<16x1xf32> -> vector<16x1xf32>
    %22 = vector.broadcast %21 : vector<16x1xf32> to vector<16x16xf32>
    %23 = arith.mulf %18, %22 : vector<16x16xf32>
    %cst_14 = arith.constant dense<0.000000e+00> : vector<16x8xf32>
    %24 = tpu.matmul %23, %12, %cst_14 {dimension_numbers = #tpu.dot_dimension_numbers<[1], [0], [0], [1], [0, 0, 1, 1], [], []>} : vector<16x16xf32>, vector<16x8xf32>, vector<16x8xf32> -> vector<16x8xf32>
    %c0_15 = arith.constant 0 : index
    %c0_16 = arith.constant 0 : index
    %25 = vector.load %arg7[%c0_15, %c0_16] : memref<32x32xf32, #tpu.memory_space<vmem>>, vector<8x32xf32>
    %cst_17 = arith.constant dense<0.000000e+00> : vector<16x32xf32>
    %26 = tpu.matmul %24, %25, %cst_17 {dimension_numbers = #tpu.dot_dimension_numbers<[1], [0], [0], [1], [0, 0, 1, 1], [], []>} : vector<16x8xf32>, vector<8x32xf32>, vector<16x32xf32> -> vector<16x32xf32>
    %27 = arith.addf %9, %26 : vector<16x32xf32>
    %28 = vector.extract_strided_slice %8 {offsets = [0, 8], sizes = [16, 8], strides = [1, 1]} : vector<16x32xf32> to vector<16x8xf32>
    %c0_18 = arith.constant 0 : index
    %c8 = arith.constant 8 : index
    %29 = vector.load %arg10[%c0_18, %c8] : memref<16x32xf32, #tpu.memory_space<vmem>>, vector<16x8xf32>
    %c0_19 = arith.constant 0 : index
    %c8_20 = arith.constant 8 : index
    %30 = vector.load %arg11[%c0_19, %c8_20] : memref<16x32xf32, #tpu.memory_space<vmem>>, vector<16x8xf32>
    %cst_21 = arith.constant dense<0.000000e+00> : vector<16x16xf32>
    %31 = tpu.matmul %28, %29, %cst_21 {dimension_numbers = #tpu.dot_dimension_numbers<[1], [1], [0], [0], [0, 0, 1, 0], [], []>} : vector<16x8xf32>, vector<16x8xf32>, vector<16x16xf32> -> vector<16x16xf32>
    %cst_22 = arith.constant dense<0xFF800000> : vector<16xf32>
    %32 = vector.multi_reduction <maximumf>, %31, %cst_22 [1] : vector<16x16xf32> to vector<16xf32>
    %33 = vector.shape_cast %32 : vector<16xf32> to vector<16x1xf32>
    %34 = vector.broadcast %33 : vector<16x1xf32> to vector<16x16xf32>
    %35 = arith.subf %31, %34 : vector<16x16xf32>
    %36 = math.exp %35 : vector<16x16xf32>
    %cst_23 = arith.constant dense<0.000000e+00> : vector<16xf32>
    %37 = vector.multi_reduction <add>, %36, %cst_23 [1] : vector<16x16xf32> to vector<16xf32>
    %38 = vector.shape_cast %37 : vector<16xf32> to vector<16x1xf32>
    %39 = tpu.reciprocal %38 {approx = true} : vector<16x1xf32> -> vector<16x1xf32>
    %40 = vector.broadcast %39 : vector<16x1xf32> to vector<16x16xf32>
    %41 = arith.mulf %36, %40 : vector<16x16xf32>
    %cst_24 = arith.constant dense<0.000000e+00> : vector<16x8xf32>
    %42 = tpu.matmul %41, %30, %cst_24 {dimension_numbers = #tpu.dot_dimension_numbers<[1], [0], [0], [1], [0, 0, 1, 1], [], []>} : vector<16x16xf32>, vector<16x8xf32>, vector<16x8xf32> -> vector<16x8xf32>
    %c8_25 = arith.constant 8 : index
    %c0_26 = arith.constant 0 : index
    %43 = vector.load %arg7[%c8_25, %c0_26] : memref<32x32xf32, #tpu.memory_space<vmem>>, vector<8x32xf32>
    %cst_27 = arith.constant dense<0.000000e+00> : vector<16x32xf32>
    %44 = tpu.matmul %42, %43, %cst_27 {dimension_numbers = #tpu.dot_dimension_numbers<[1], [0], [0], [1], [0, 0, 1, 1], [], []>} : vector<16x8xf32>, vector<8x32xf32>, vector<16x32xf32> -> vector<16x32xf32>
    %45 = arith.addf %27, %44 : vector<16x32xf32>
    %46 = vector.extract_strided_slice %8 {offsets = [0, 16], sizes = [16, 8], strides = [1, 1]} : vector<16x32xf32> to vector<16x8xf32>
    %c0_28 = arith.constant 0 : index
    %c16 = arith.constant 16 : index
    %47 = vector.load %arg10[%c0_28, %c16] : memref<16x32xf32, #tpu.memory_space<vmem>>, vector<16x8xf32>
    %c0_29 = arith.constant 0 : index
    %c16_30 = arith.constant 16 : index
    %48 = vector.load %arg11[%c0_29, %c16_30] : memref<16x32xf32, #tpu.memory_space<vmem>>, vector<16x8xf32>
    %cst_31 = arith.constant dense<0.000000e+00> : vector<16x16xf32>
    %49 = tpu.matmul %46, %47, %cst_31 {dimension_numbers = #tpu.dot_dimension_numbers<[1], [1], [0], [0], [0, 0, 1, 0], [], []>} : vector<16x8xf32>, vector<16x8xf32>, vector<16x16xf32> -> vector<16x16xf32>
    %cst_32 = arith.constant dense<0xFF800000> : vector<16xf32>
    %50 = vector.multi_reduction <maximumf>, %49, %cst_32 [1] : vector<16x16xf32> to vector<16xf32>
    %51 = vector.shape_cast %50 : vector<16xf32> to vector<16x1xf32>
    %52 = vector.broadcast %51 : vector<16x1xf32> to vector<16x16xf32>
    %53 = arith.subf %49, %52 : vector<16x16xf32>
    %54 = math.exp %53 : vector<16x16xf32>
    %cst_33 = arith.constant dense<0.000000e+00> : vector<16xf32>
    %55 = vector.multi_reduction <add>, %54, %cst_33 [1] : vector<16x16xf32> to vector<16xf32>
    %56 = vector.shape_cast %55 : vector<16xf32> to vector<16x1xf32>
    %57 = tpu.reciprocal %56 {approx = true} : vector<16x1xf32> -> vector<16x1xf32>
    %58 = vector.broadcast %57 : vector<16x1xf32> to vector<16x16xf32>
    %59 = arith.mulf %54, %58 : vector<16x16xf32>
    %cst_34 = arith.constant dense<0.000000e+00> : vector<16x8xf32>
    %60 = tpu.matmul %59, %48, %cst_34 {dimension_numbers = #tpu.dot_dimension_numbers<[1], [0], [0], [1], [0, 0, 1, 1], [], []>} : vector<16x16xf32>, vector<16x8xf32>, vector<16x8xf32> -> vector<16x8xf32>
    %c16_35 = arith.constant 16 : index
    %c0_36 = arith.constant 0 : index
    %61 = vector.load %arg7[%c16_35, %c0_36] : memref<32x32xf32, #tpu.memory_space<vmem>>, vector<8x32xf32>
    %cst_37 = arith.constant dense<0.000000e+00> : vector<16x32xf32>
    %62 = tpu.matmul %60, %61, %cst_37 {dimension_numbers = #tpu.dot_dimension_numbers<[1], [0], [0], [1], [0, 0, 1, 1], [], []>} : vector<16x8xf32>, vector<8x32xf32>, vector<16x32xf32> -> vector<16x32xf32>
    %63 = arith.addf %45, %62 : vector<16x32xf32>
    %64 = vector.extract_strided_slice %8 {offsets = [0, 24], sizes = [16, 8], strides = [1, 1]} : vector<16x32xf32> to vector<16x8xf32>
    %c0_38 = arith.constant 0 : index
    %c24 = arith.constant 24 : index
    %65 = vector.load %arg10[%c0_38, %c24] : memref<16x32xf32, #tpu.memory_space<vmem>>, vector<16x8xf32>
    %c0_39 = arith.constant 0 : index
    %c24_40 = arith.constant 24 : index
    %66 = vector.load %arg11[%c0_39, %c24_40] : memref<16x32xf32, #tpu.memory_space<vmem>>, vector<16x8xf32>
    %cst_41 = arith.constant dense<0.000000e+00> : vector<16x16xf32>
    %67 = tpu.matmul %64, %65, %cst_41 {dimension_numbers = #tpu.dot_dimension_numbers<[1], [1], [0], [0], [0, 0, 1, 0], [], []>} : vector<16x8xf32>, vector<16x8xf32>, vector<16x16xf32> -> vector<16x16xf32>
    %cst_42 = arith.constant dense<0xFF800000> : vector<16xf32>
    %68 = vector.multi_reduction <maximumf>, %67, %cst_42 [1] : vector<16x16xf32> to vector<16xf32>
    %69 = vector.shape_cast %68 : vector<16xf32> to vector<16x1xf32>
    %70 = vector.broadcast %69 : vector<16x1xf32> to vector<16x16xf32>
    %71 = arith.subf %67, %70 : vector<16x16xf32>
    %72 = math.exp %71 : vector<16x16xf32>
    %cst_43 = arith.constant dense<0.000000e+00> : vector<16xf32>
    %73 = vector.multi_reduction <add>, %72, %cst_43 [1] : vector<16x16xf32> to vector<16xf32>
    %74 = vector.shape_cast %73 : vector<16xf32> to vector<16x1xf32>
    %75 = tpu.reciprocal %74 {approx = true} : vector<16x1xf32> -> vector<16x1xf32>
    %76 = vector.broadcast %75 : vector<16x1xf32> to vector<16x16xf32>
    %77 = arith.mulf %72, %76 : vector<16x16xf32>
    %cst_44 = arith.constant dense<0.000000e+00> : vector<16x8xf32>
    %78 = tpu.matmul %77, %66, %cst_44 {dimension_numbers = #tpu.dot_dimension_numbers<[1], [0], [0], [1], [0, 0, 1, 1], [], []>} : vector<16x16xf32>, vector<16x8xf32>, vector<16x8xf32> -> vector<16x8xf32>
    %c24_45 = arith.constant 24 : index
    %c0_46 = arith.constant 0 : index
    %79 = vector.load %arg7[%c24_45, %c0_46] : memref<32x32xf32, #tpu.memory_space<vmem>>, vector<8x32xf32>
    %cst_47 = arith.constant dense<0.000000e+00> : vector<16x32xf32>
    %80 = tpu.matmul %78, %79, %cst_47 {dimension_numbers = #tpu.dot_dimension_numbers<[1], [0], [0], [1], [0, 0, 1, 1], [], []>} : vector<16x8xf32>, vector<8x32xf32>, vector<16x32xf32> -> vector<16x32xf32>
    %81 = arith.addf %63, %80 : vector<16x32xf32>
    %c0_48 = arith.constant 0 : index
    %c0_49 = arith.constant 0 : index
    %82 = vector.load %arg8[%c0_48, %c0_49] : memref<1x32xf32, #tpu.memory_space<vmem>>, vector<1x32xf32>
    %83 = vector.broadcast %82 : vector<1x32xf32> to vector<16x32xf32>
    %84 = arith.addf %81, %83 : vector<16x32xf32>
    %c0_50 = arith.constant 0 : index
    %c0_51 = arith.constant 0 : index
    %c0_52 = arith.constant 0 : index
    %85 = vector.load %arg9[%c0_50, %c0_51, %c0_52] : memref<1x16x32xf32, #tpu.memory_space<vmem>>, vector<1x16x32xf32>
    %86 = vector.shape_cast %85 : vector<1x16x32xf32> to vector<16x32xf32>
    %87 = vector.shape_cast %84 : vector<16x32xf32> to vector<1x16x32xf32>
    tpu.vector_store %arg9[%c0_50, %c0_51, %c0_52], %87 {strides = array<i32>} : memref<1x16x32xf32, #tpu.memory_space<vmem>>, vector<1x16x32xf32>,
    return
  }
  func.func @transform_0(%arg0: i32, %arg1: i32) -> (i32, i32, i32) {
    %c0_i32 = arith.constant 0 : i32
    %c0_i32_0 = arith.constant 0 : i32
    return %arg0, %arg1, %c0_i32 : i32, i32, i32
  }
  func.func @transform_1(%arg0: i32, %arg1: i32) -> (i32, i32, i32) {
    %c0_i32 = arith.constant 0 : i32
    %c0_i32_0 = arith.constant 0 : i32
    %c0_i32_1 = arith.constant 0 : i32
    return %arg0, %c0_i32, %c0_i32_0 : i32, i32, i32
  }
  func.func @transform_2(%arg0: i32, %arg1: i32) -> (i32, i32) {
    %c0_i32 = arith.constant 0 : i32
    %c0_i32_0 = arith.constant 0 : i32
    %c0_i32_1 = arith.constant 0 : i32
    return %c0_i32, %c0_i32_0 : i32, i32
  }
  func.func @transform_3(%arg0: i32, %arg1: i32) -> (i32, i32) {
    %c0_i32 = arith.constant 0 : i32
    %c0_i32_0 = arith.constant 0 : i32
    %c0_i32_1 = arith.constant 0 : i32
    return %c0_i32, %c0_i32_0 : i32, i32
  }
  func.func @transform_4(%arg0: i32, %arg1: i32) -> (i32, i32) {
    %c0_i32 = arith.constant 0 : i32
    %c0_i32_0 = arith.constant 0 : i32
    %c0_i32_1 = arith.constant 0 : i32
    return %c0_i32, %c0_i32_0 : i32, i32
  }
  func.func @transform_5(%arg0: i32, %arg1: i32) -> (i32, i32) {
    %c0_i32 = arith.constant 0 : i32
    %c0_i32_0 = arith.constant 0 : i32
    %c0_i32_1 = arith.constant 0 : i32
    return %c0_i32, %c0_i32_0 : i32, i32
  }
  func.func @transform_6(%arg0: i32, %arg1: i32) -> (i32, i32) {
    %c0_i32 = arith.constant 0 : i32
    %c0_i32_0 = arith.constant 0 : i32
    %c0_i32_1 = arith.constant 0 : i32
    return %c0_i32, %c0_i32_0 : i32, i32
  }
  func.func @transform_7(%arg0: i32, %arg1: i32) -> (i32, i32, i32) {
    %c0_i32 = arith.constant 0 : i32
    %c0_i32_0 = arith.constant 0 : i32
    return %arg0, %arg1, %c0_i32 : i32, i32, i32
  }
}

</mosaic_0001>

<llo_original>
// kernel: tpu_custom_call.1
$region0: #{tpu_custom_call.1}
  #allocation0 [shape = 'u32[]', space=smem, size = 0x4, offset = 0x4, fixed_abs, tag = 'smem constant byte address 0x4 - core index']
  #allocation1 [shape = 'u32[72,128]{1,0:T(1,128)}', space=vmem, size = 0x9000, scoped, tag = 'internal scratch']
  #allocation2 [shape = 'f32[16,32]{1,0:T(8,128)}', space=vmem, size = 0x2000, scoped, tag = 'scratch operand']
  #allocation3 [shape = 'f32[16,32]{1,0:T(8,128)}', space=vmem, size = 0x2000, scoped, tag = 'scratch operand']
  %s0 = inlined_call_operand.hbm [shape: f32[2,32,32], index: 0, kind: input, shape index: {}]
  %s1 = inlined_call_operand.hbm [shape: f32[2,16,32], index: 1, kind: input, shape index: {}]
  %s2 = inlined_call_operand.hbm [shape: f32[32,32], index: 2, kind: input, shape index: {}]
  %s3 = inlined_call_operand.hbm [shape: f32[32,32], index: 3, kind: input, shape index: {}]
  %s4 = inlined_call_operand.hbm [shape: f32[32,32], index: 4, kind: input, shape index: {}]
  %s5 = inlined_call_operand.hbm [shape: f32[32,32], index: 5, kind: input, shape index: {}]
  %s6 = inlined_call_operand.vmem [shape: f32[1,32], index: 6, kind: input, shape index: {}]
  %s7 = inlined_call_operand.hbm [shape: f32[2,32,32], index: 7, kind: output, shape index: {}]
  %s8 = sld [smem:[#allocation0]]
  $region89: #{tpu_custom_call.1} parent=0
    _
  %s10 = ssub.s32 1, %s8
  %s11 = scalar_select 0, %s10, %s8
  $region1: #{tpu_custom_call.1} parent=0
    #allocation4 [shape = 'u8[16384]{0}', space=vmem, size = 0x4000, scoped, tag = 'input window, operand 0']
    #allocation5 [shape = 's32[2]{0}', space=sflag, size = 0x8, scoped, tag = 'scoped memory for tpu_custom_call.1']
    #allocation6 [shape = 's32[2]{0}', space=sflag, size = 0x8, scoped, tag = 'scoped memory for tpu_custom_call.1']
    #allocation7 [shape = 'u8[8192]{0}', space=vmem, size = 0x2000, scoped, tag = 'input window, operand 1, single buffered']
    #allocation8 [shape = 's32[1]{0}', space=sflag, size = 0x4, scoped, tag = 'scoped memory for tpu_custom_call.1']
    #allocation9 [shape = 'u8[16384]{0}', space=vmem, size = 0x4000, scoped, tag = 'input window, operand 2, single buffered']
    #allocation10 [shape = 'u8[16384]{0}', space=vmem, size = 0x4000, scoped, tag = 'input window, operand 3, single buffered']
    #allocation11 [shape = 's32[1]{0}', space=sflag, size = 0x4, scoped, tag = 'scoped memory for tpu_custom_call.1']
    #allocation12 [shape = 'u8[16384]{0}', space=vmem, size = 0x4000, scoped, tag = 'input window, operand 4, single buffered']
    #allocation13 [shape = 'u8[16384]{0}', space=vmem, size = 0x4000, scoped, tag = 'input window, operand 5, single buffered']
    #allocation14 [shape = 's32[1]{0}', space=sflag, size = 0x4, scoped, tag = 'scoped memory for tpu_custom_call.1']
    #allocation15 [shape = 'u8[16384]{0}', space=vmem, size = 0x4000, scoped, tag = 'output window, operand 0']
    %12 = vsyncpa [#allocation5], 0
    %s13 = scalar_lea.sflag [#allocation5], 1
    %14 = vsyncpa %s13, 0
    %15 = vsyncpa [#allocation8], 0
    %16 = vsyncpa [#allocation11], 0
    %17 = vsyncpa [#allocation14], 0
    %18 = vsyncpa [#allocation6], 0
    %s19 = scalar_lea.sflag [#allocation6], 1
    %20 = vsyncpa %s19, 0
    loop: start=0, step=1, limit=6
    $region2: #{tpu_custom_call.1} parent=1 // loop_pre_header
      _
    $region3: #{tpu_custom_call.1} parent=1 // loop_header
      %s22 = sphi 0, %s26
      %p23 = scmp.ge.s32.totalorder %s22, 6
      %s29 = sphi 0, %s41
      %s30 = sphi 0, %s37
      %s31 = sphi 0, %s29
      %s32 = sphi 0, %s30
      %s33 = sphi 0, %s31
      %s34 = sphi 0, %s32
      %s46 = sphi 0, %s48
      %s49 = sphi 0, %s46
      %s50 = sphi 0, %s49
      %s66 = sphi 0, %s50
      %s72 = sphi 0, %s74
      %s75 = sphi 0, %s72
      %s76 = sphi 0, %s75
      %s92 = sphi 0, %s76
      %s96 = sphi 0, %s96
      %s98 = sphi 0, %s96
      %s99 = sphi 0, %s98
      %s113 = sphi 0, %s99
      %s117 = sphi 0, %s117
      %s119 = sphi 0, %s117
      %s120 = sphi 0, %s119
      %s134 = sphi 0, %s120
      %s138 = sphi 0, %s138
      %s140 = sphi 0, %s138
      %s141 = sphi 0, %s140
      %s155 = sphi 0, %s141
      %s159 = sphi 0, %s159
      %s161 = sphi 0, %s159
      %s162 = sphi 0, %s161
      %s176 = sphi 0, %s162
      %s180 = sphi 0, %s180
      %s182 = sphi 0, %s180
      %s183 = sphi 0, %s182
      %s197 = sphi 0, %s183
      %s205 = sphi 0, %s207
      %s208 = sphi 0, %s205
      %s209 = sphi 0, %s208
      %s225 = sphi 0, %s209
    $region4: #{tpu_custom_call.1} parent=1 // loop_header_branch
      %25 = sbr.rel (%p23) target = $region8
    $region5: #{tpu_custom_call.1} parent=1 // loop_body
      %s27 = ssub.s32 %s22, 1
      %s28 = ssub.s32 %s22, 2
      %s35 = sadd.s32 1, %s30
      %p36 = scmp.ge.s32.totalorder %s35, 2
      %s37 = scalar_select %p36, 0, %s35
      %s38 = sadd.s32 1, %s29
      %s39 = scalar_select %p36, %s38, %s29
      %p40 = scmp.ge.s32.totalorder %s39, 2
      %s41 = scalar_select %p40, 0, %s39
      %s42 = ssub.s32 %s29, %s41
      %s43 = ssub.s32 %s30, %s37
      %s44 = sor.u32 %s42, %s43
      %p45 = scmp.eq.s32.totalorder %s44, 0
      %s47 = sadd.s32 %s46, 1
      %s48 = scalar_select %p45, %s46, %s47
      %p51 = pneg %p45
      %p52 = scmp.eq.s32.totalorder %s22, 3
      %p53 = por %p51, %p52
      %p54 = scmp.ne.s32.totalorder %s46, %s49
      %p55 = scmp.eq.s32.totalorder %s22, 0
      %p56 = por %p54, %p55
      %p57 = scmp.ne.s32.totalorder %s46, %s49
      %p58 = scmp.eq.s32.totalorder %s27, 3
      %p59 = por %p57, %p58
      %p60 = scmp.ne.s32.totalorder %s49, %s50
      %p61 = scmp.eq.s32.totalorder %s27, 0
      %p62 = por %p60, %p61
      %p63 = scmp.ne.s32.totalorder %s49, %s50
      %p64 = scmp.eq.s32.totalorder %s28, 3
      %p65 = por %p63, %p64
      %p67 = scmp.ne.s32.totalorder %s50, %s66
      %p68 = scmp.eq.s32.totalorder %s28, 0
      %p69 = por %p67, %p68
      %s70 = ssub.s32 %s29, %s41
      %p71 = scmp.eq.s32.totalorder %s70, 0
      %s73 = sadd.s32 %s72, 1
      %s74 = scalar_select %p71, %s72, %s73
      %p77 = pneg %p71
      %p78 = scmp.eq.s32.totalorder %s22, 3
      %p79 = por %p77, %p78
      %p80 = scmp.ne.s32.totalorder %s72, %s75
      %p81 = scmp.eq.s32.totalorder %s22, 0
      %p82 = por %p80, %p81
      %p83 = scmp.ne.s32.totalorder %s72, %s75
      %p84 = scmp.eq.s32.totalorder %s27, 3
      %p85 = por %p83, %p84
      %p86 = scmp.ne.s32.totalorder %s75, %s76
      %p87 = scmp.eq.s32.totalorder %s27, 0
      %p88 = por %p86, %p87
      %p89 = scmp.ne.s32.totalorder %s75, %s76
      %p90 = scmp.eq.s32.totalorder %s28, 3
      %p91 = por %p89, %p90
      %p93 = scmp.ne.s32.totalorder %s76, %s92
      %p94 = scmp.eq.s32.totalorder %s28, 0
      %p95 = por %p93, %p94
      %s97 = sadd.s32 %s96, 1
      %p100 = scmp.eq.s32.totalorder %s22, 3
      %p101 = scmp.ne.s32.totalorder %s96, %s98
      %p102 = scmp.eq.s32.totalorder %s22, 0
      %p103 = por %p101, %p102
      %p104 = scmp.ne.s32.totalorder %s96, %s98
      %p105 = scmp.eq.s32.totalorder %s27, 3
      %p106 = por %p104, %p105
      %p107 = scmp.ne.s32.totalorder %s98, %s99
      %p108 = scmp.eq.s32.totalorder %s27, 0
      %p109 = por %p107, %p108
      %p110 = scmp.ne.s32.totalorder %s98, %s99
      %p111 = scmp.eq.s32.totalorder %s28, 3
      %p112 = por %p110, %p111
      %p114 = scmp.ne.s32.totalorder %s99, %s113
      %p115 = scmp.eq.s32.totalorder %s28, 0
      %p116 = por %p114, %p115
      %s118 = sadd.s32 %s117, 1
      %p121 = scmp.eq.s32.totalorder %s22, 3
      %p122 = scmp.ne.s32.totalorder %s117, %s119
      %p123 = scmp.eq.s32.totalorder %s22, 0
      %p124 = por %p122, %p123
      %p125 = scmp.ne.s32.totalorder %s117, %s119
      %p126 = scmp.eq.s32.totalorder %s27, 3
      %p127 = por %p125, %p126
      %p128 = scmp.ne.s32.totalorder %s119, %s120
      %p129 = scmp.eq.s32.totalorder %s27, 0
      %p130 = por %p128, %p129
      %p131 = scmp.ne.s32.totalorder %s119, %s120
      %p132 = scmp.eq.s32.totalorder %s28, 3
      %p133 = por %p131, %p132
      %p135 = scmp.ne.s32.totalorder %s120, %s134
      %p136 = scmp.eq.s32.totalorder %s28, 0
      %p137 = por %p135, %p136
      %s139 = sadd.s32 %s138, 1
      %p142 = scmp.eq.s32.totalorder %s22, 3
      %p143 = scmp.ne.s32.totalorder %s138, %s140
      %p144 = scmp.eq.s32.totalorder %s22, 0
      %p145 = por %p143, %p144
      %p146 = scmp.ne.s32.totalorder %s138, %s140
      %p147 = scmp.eq.s32.totalorder %s27, 3
      %p148 = por %p146, %p147
      %p149 = scmp.ne.s32.totalorder %s140, %s141
      %p150 = scmp.eq.s32.totalorder %s27, 0
      %p151 = por %p149, %p150
      %p152 = scmp.ne.s32.totalorder %s140, %s141
      %p153 = scmp.eq.s32.totalorder %s28, 3
      %p154 = por %p152, %p153
      %p156 = scmp.ne.s32.totalorder %s141, %s155
      %p157 = scmp.eq.s32.totalorder %s28, 0
      %p158 = por %p156, %p157
      %s160 = sadd.s32 %s159, 1
      %p163 = scmp.eq.s32.totalorder %s22, 3
      %p164 = scmp.ne.s32.totalorder %s159, %s161
      %p165 = scmp.eq.s32.totalorder %s22, 0
      %p166 = por %p164, %p165
      %p167 = scmp.ne.s32.totalorder %s159, %s161
      %p168 = scmp.eq.s32.totalorder %s27, 3
      %p169 = por %p167, %p168
      %p170 = scmp.ne.s32.totalorder %s161, %s162
      %p171 = scmp.eq.s32.totalorder %s27, 0
      %p172 = por %p170, %p171
      %p173 = scmp.ne.s32.totalorder %s161, %s162
      %p174 = scmp.eq.s32.totalorder %s28, 3
      %p175 = por %p173, %p174
      %p177 = scmp.ne.s32.totalorder %s162, %s176
      %p178 = scmp.eq.s32.totalorder %s28, 0
      %p179 = por %p177, %p178
      %s181 = sadd.s32 %s180, 1
      %p184 = scmp.eq.s32.totalorder %s22, 3
      %p185 = scmp.ne.s32.totalorder %s180, %s182
      %p186 = scmp.eq.s32.totalorder %s22, 0
      %p187 = por %p185, %p186
      %p188 = scmp.ne.s32.totalorder %s180, %s182
      %p189 = scmp.eq.s32.totalorder %s27, 3
      %p190 = por %p188, %p189
      %p191 = scmp.ne.s32.totalorder %s182, %s183
      %p192 = scmp.eq.s32.totalorder %s27, 0
      %p193 = por %p191, %p192
      %p194 = scmp.ne.s32.totalorder %s182, %s183
      %p195 = scmp.eq.s32.totalorder %s28, 3
      %p196 = por %p194, %p195
      %p198 = scmp.ne.s32.totalorder %s183, %s197
      %p199 = scmp.eq.s32.totalorder %s28, 0
      %p200 = por %p198, %p199
      %s201 = ssub.s32 %s29, %s41
      %s202 = ssub.s32 %s30, %s37
      %s203 = sor.u32 %s201, %s202
      %p204 = scmp.eq.s32.totalorder %s203, 0
      %s206 = sadd.s32 %s205, 1
      %s207 = scalar_select %p204, %s205, %s206
      %p210 = pneg %p204
      %p211 = scmp.eq.s32.totalorder %s22, 3
      %p212 = por %p210, %p211
      %p213 = scmp.ne.s32.totalorder %s205, %s208
      %p214 = scmp.eq.s32.totalorder %s22, 0
      %p215 = por %p213, %p214
      %p216 = scmp.ne.s32.totalorder %s205, %s208
      %p217 = scmp.eq.s32.totalorder %s27, 3
      %p218 = por %p216, %p217
      %p219 = scmp.ne.s32.totalorder %s208, %s209
      %p220 = scmp.eq.s32.totalorder %s27, 0
      %p221 = por %p219, %p220
      %p222 = scmp.ne.s32.totalorder %s208, %s209
      %p223 = scmp.eq.s32.totalorder %s28, 3
      %p224 = por %p222, %p223
      %p226 = scmp.ne.s32.totalorder %s209, %s225
      %p227 = scmp.eq.s32.totalorder %s28, 0
      %p228 = por %p226, %p227
      %p229 = scmp.le.s32.totalorder 1, %s22
      %p230 = scmp.lt.s32.totalorder %s22, 5
      %p231 = pnand %p229, %p230
      %p232 = pneg %p231
      // Predicated region
      $region9: #{tpu_custom_call.1} parent=5 // pred_check
        _
      $region10: #{tpu_custom_call.1} parent=5 // pred_check_branch
        %234 = sbr.rel (%p231) target = $region12
      $region11: #{tpu_custom_call.1} parent=5 // pred_region
        %s235 = ssub.s32 %s22, 1
        // Predicated region
        $region13: #{tpu_custom_call.1} parent=11 // pred_check
          %p236 = pneg %p88
        $region14: #{tpu_custom_call.1} parent=11 // pred_check_branch
          %238 = sbr.rel (%p236) target = $region16
        $region15: #{tpu_custom_call.1} parent=11 // pred_region
          %240 = vsyncadd [#allocation8], 0
          %s241 = smul.addr %s31, 2
          %s242 = smul.addr %s241, 8
          %s243 = scalar_lea.hbm %s1, %s242
          %s244 = sshll.u32 %s243, 4
          %s245 = int_to_ptr.hbm [resolvable:$true] %s244
          %s246 = sshll.u32 [#allocation7], 4
          %s247 = int_to_ptr.vmem [resolvable:$true] %s246
          %252 = dma.hbm_to_vmem [thread:$0]  %s245, 256, %s247, [#allocation8], 128, 128, 8
        $region16: #{tpu_custom_call.1} parent=11 // pred_fallthru
          _
        // Predicated region
        $region17: #{tpu_custom_call.1} parent=11 // pred_check
          %p253 = pneg %p109
        $region18: #{tpu_custom_call.1} parent=11 // pred_check_branch
          %255 = sbr.rel (%p253) target = $region20
        $region19: #{tpu_custom_call.1} parent=11 // pred_region
          %257 = vsyncadd [#allocation8], 0
          %s258 = sshll.u32 %s2, 4
          %s259 = int_to_ptr.hbm [resolvable:$true] %s258
          %s260 = sshll.u32 [#allocation9], 4
          %s261 = int_to_ptr.vmem [resolvable:$true] %s260
          %266 = dma.hbm_to_vmem [thread:$0]  %s259, 512, %s261, [#allocation8], 128, 128, 8
        $region20: #{tpu_custom_call.1} parent=11 // pred_fallthru
          _
        // Predicated region
        $region21: #{tpu_custom_call.1} parent=11 // pred_check
          %p267 = pneg %p130
        $region22: #{tpu_custom_call.1} parent=11 // pred_check_branch
          %269 = sbr.rel (%p267) target = $region24
        $region23: #{tpu_custom_call.1} parent=11 // pred_region
          %271 = vsyncadd [#allocation11], 0
          %s272 = sshll.u32 %s3, 4
          %s273 = int_to_ptr.hbm [resolvable:$true] %s272
          %s274 = sshll.u32 [#allocation10], 4
          %s275 = int_to_ptr.vmem [resolvable:$true] %s274
          %280 = dma.hbm_to_vmem [thread:$0]  %s273, 512, %s275, [#allocation11], 128, 128, 8
        $region24: #{tpu_custom_call.1} parent=11 // pred_fallthru
          _
        // Predicated region
        $region25: #{tpu_custom_call.1} parent=11 // pred_check
          %p281 = pneg %p151
        $region26: #{tpu_custom_call.1} parent=11 // pred_check_branch
          %283 = sbr.rel (%p281) target = $region28
        $region27: #{tpu_custom_call.1} parent=11 // pred_region
          %285 = vsyncadd [#allocation11], 0
          %s286 = sshll.u32 %s4, 4
          %s287 = int_to_ptr.hbm [resolvable:$true] %s286
          %s288 = sshll.u32 [#allocation12], 4
          %s289 = int_to_ptr.vmem [resolvable:$true] %s288
          %294 = dma.hbm_to_vmem [thread:$0]  %s287, 512, %s289, [#allocation11], 128, 128, 8
        $region28: #{tpu_custom_call.1} parent=11 // pred_fallthru
          _
        // Predicated region
        $region29: #{tpu_custom_call.1} parent=11 // pred_check
          %p295 = pneg %p172
        $region30: #{tpu_custom_call.1} parent=11 // pred_check_branch
          %297 = sbr.rel (%p295) target = $region32
        $region31: #{tpu_custom_call.1} parent=11 // pred_region
          %299 = vsyncadd [#allocation14], 0
          %s300 = sshll.u32 %s5, 4
          %s301 = int_to_ptr.hbm [resolvable:$true] %s300
          %s302 = sshll.u32 [#allocation13], 4
          %s303 = int_to_ptr.vmem [resolvable:$true] %s302
          %308 = dma.hbm_to_vmem [thread:$0]  %s301, 512, %s303, [#allocation14], 128, 128, 8
        $region32: #{tpu_custom_call.1} parent=11 // pred_fallthru
          _
        // Predicated region
        $region33: #{tpu_custom_call.1} parent=11 // pred_check
          %p309 = pneg %p193
        $region34: #{tpu_custom_call.1} parent=11 // pred_check_branch
          %311 = sbr.rel (%p309) target = $region36
        $region35: #{tpu_custom_call.1} parent=11 // pred_region
          _
        $region36: #{tpu_custom_call.1} parent=11 // pred_fallthru
          _
      $region12: #{tpu_custom_call.1} parent=5 // pred_fallthru
        _
      %p312 = scmp.lt.s32.totalorder %s22, 4
      // Predicated region
      $region37: #{tpu_custom_call.1} parent=5 // pred_check
        %p313 = pneg %p312
      $region38: #{tpu_custom_call.1} parent=5 // pred_check_branch
        %315 = sbr.rel (%p313) target = $region40
      $region39: #{tpu_custom_call.1} parent=5 // pred_region
        // Predicated region
        $region41: #{tpu_custom_call.1} parent=39 // pred_check
          %p316 = pneg %p56
        $region42: #{tpu_custom_call.1} parent=39 // pred_check_branch
          %318 = sbr.rel (%p316) target = $region44
        $region43: #{tpu_custom_call.1} parent=39 // pred_region
          %s319 = sand.u32 %s46, 1
          %s320 = scalar_lea.sflag [#allocation5], %s319
          %s321 = sand.u32 %s46, 1
          %s322 = smul.addr %s321, 16
          %s323 = scalar_lea.vmem [#allocation4], %s322
          %s324 = smul.u32 2, %s30
          %326 = vsyncadd %s320, 0
          %s327 = smul.addr %s29, 4
          %s328 = sadd.s32 %s324, %s327
          %s329 = smul.addr %s328, 8
          %s330 = scalar_lea.hbm %s0, %s329
          %s331 = sshll.u32 %s330, 4
          %s332 = int_to_ptr.hbm [resolvable:$true] %s331
          %s333 = sshll.u32 %s323, 4
          %s334 = int_to_ptr.vmem [resolvable:$true] %s333
          %339 = dma.hbm_to_vmem [thread:$0]  %s332, 256, %s334, %s320, 128, 128, 8
        $region44: #{tpu_custom_call.1} parent=39 // pred_fallthru
          _
      $region40: #{tpu_custom_call.1} parent=5 // pred_fallthru
        _
      %p340 = scmp.le.s32.totalorder 1, %s22
      %p341 = scmp.lt.s32.totalorder %s22, 5
      %p342 = pnand %p340, %p341
      %p343 = pneg %p342
      // Predicated region
      $region45: #{tpu_custom_call.1} parent=5 // pred_check
        _
      $region46: #{tpu_custom_call.1} parent=5 // pred_check_branch
        %345 = sbr.rel (%p342) target = $region48
      $region47: #{tpu_custom_call.1} parent=5 // pred_region
        %s346 = ssub.s32 %s22, 1
        %s347 = sand.u32 %s49, 1
        %s348 = scalar_lea.sflag [#allocation5], %s347
        %s349 = sand.u32 %s49, 1
        %s350 = smul.addr %s349, 16
        %s351 = scalar_lea.vmem [#allocation4], %s350
        // Predicated region
        $region49: #{tpu_custom_call.1} parent=47 // pred_check
          %p352 = pneg %p62
        $region50: #{tpu_custom_call.1} parent=47 // pred_check_branch
          %354 = sbr.rel (%p352) target = $region52
        $region51: #{tpu_custom_call.1} parent=47 // pred_region
          %356 = dma.done %s348, 256
        $region52: #{tpu_custom_call.1} parent=47 // pred_fallthru
          _
        // Predicated region
        $region53: #{tpu_custom_call.1} parent=47 // pred_check
          %p357 = pneg %p88
        $region54: #{tpu_custom_call.1} parent=47 // pred_check_branch
          %359 = sbr.rel (%p357) target = $region56
        $region55: #{tpu_custom_call.1} parent=47 // pred_region
          %361 = dma.done [#allocation8], 256
        $region56: #{tpu_custom_call.1} parent=47 // pred_fallthru
          _
        // Predicated region
        $region57: #{tpu_custom_call.1} parent=47 // pred_check
          %p362 = pneg %p109
        $region58: #{tpu_custom_call.1} parent=47 // pred_check_branch
          %364 = sbr.rel (%p362) target = $region60
        $region59: #{tpu_custom_call.1} parent=47 // pred_region
          %366 = dma.done [#allocation8], 512
        $region60: #{tpu_custom_call.1} parent=47 // pred_fallthru
          _
        // Predicated region
        $region61: #{tpu_custom_call.1} parent=47 // pred_check
          %p367 = pneg %p130
        $region62: #{tpu_custom_call.1} parent=47 // pred_check_branch
          %369 = sbr.rel (%p367) target = $region64
        $region63: #{tpu_custom_call.1} parent=47 // pred_region
          %371 = dma.done [#allocation11], 512
        $region64: #{tpu_custom_call.1} parent=47 // pred_fallthru
          _
        // Predicated region
        $region65: #{tpu_custom_call.1} parent=47 // pred_check
          %p372 = pneg %p151
        $region66: #{tpu_custom_call.1} parent=47 // pred_check_branch
          %374 = sbr.rel (%p372) target = $region68
        $region67: #{tpu_custom_call.1} parent=47 // pred_region
          %376 = dma.done [#allocation11], 512
        $region68: #{tpu_custom_call.1} parent=47 // pred_fallthru
          _
        // Predicated region
        $region69: #{tpu_custom_call.1} parent=47 // pred_check
          %p377 = pneg %p172
        $region70: #{tpu_custom_call.1} parent=47 // pred_check_branch
          %379 = sbr.rel (%p377) target = $region72
        $region71: #{tpu_custom_call.1} parent=47 // pred_region
          %381 = dma.done [#allocation14], 512
        $region72: #{tpu_custom_call.1} parent=47 // pred_fallthru
          _
        %s382 = sand.u32 %s49, 1
        %s383 = scalar_lea.sflag [#allocation5], %s382
        %s384 = sand.u32 %s49, 1
        %s385 = smul.addr %s384, 16
        %s386 = scalar_lea.vmem [#allocation4], %s385
        %p387 = pneg %p62
        %p388 = pneg %p59
        %p389 = pneg %p88
        %p390 = pneg %p85
        %p391 = pneg %p109
        %p392 = pneg %p106
        %p393 = pneg %p130
        %p394 = pneg %p127
        %p395 = pneg %p151
        %p396 = pneg %p148
        %p397 = pneg %p172
        %p398 = pneg %p169
        %p399 = pneg %p193
        %p400 = pneg %p190
        %p401 = pneg %p221
        %p402 = pneg %p218
        %s403 = sand.u32 %s208, 1
        %s404 = scalar_lea.sflag [#allocation6], %s403
        %s405 = sand.u32 %s208, 1
        %s406 = smul.addr %s405, 16
        %s407 = scalar_lea.vmem [#allocation15], %s406
        %s408 = smul.u32 2, %s32
        %s409 = smul.u32 2, %s32
        %p410 = scmp.eq.s32.totalorder %s32, 0
        // Predicated region
        $region73: #{tpu_custom_call.1} parent=47 // pred_check
          %p411 = pneg %p410
        $region74: #{tpu_custom_call.1} parent=47 // pred_check_branch
          %413 = sbr.rel (%p411) target = $region76
        $region75: #{tpu_custom_call.1} parent=47 // pred_region
          %v414 = vld [vmem:[#allocation7] sm:$0xff]
          %v415 = vld [vmem:[#allocation7 + $0x8] sm:$0xff]
          %v416 = vld [vmem:[#allocation10] sm:$0xff]
          %v417 = vld [vmem:[#allocation10 + $0x8] sm:$0xff]
          %v418 = vld [vmem:[#allocation10 + $0x10] sm:$0xff]
          %v419 = vld [vmem:[#allocation10 + $0x18] sm:$0xff]
          %vm420 = vcmask 261120
          %v422 = vsel %vm420, %v414, 0
          %v425 = vsel %vm420, %v415, 0
          %427 = vmatpush.msra.mxu0 0.0
          %428 = vmatpush.msra.mxu0 0.0
          %429 = vmatpush.msra.mxu0 0.0
          %430 = vmatpush.msra.mxu0 0.0
          %431 = vmatpush.msra.mxu0 0.0
          %432 = vmatpush.msra.mxu0 0.0
          %433 = vmatpush.msra.mxu0 0.0
          %434 = vmatpush.msra.mxu0 0.0
          %435 = vmatpush.msra.mxu0 0.0
          %436 = vmatpush.msra.mxu0 0.0
          %437 = vmatpush.msra.mxu0 0.0
          %438 = vmatpush.msra.mxu0 0.0
          %439 = vmatpush.msra.mxu0 %v419
          %440 = vmatpush.msra.mxu0 %v418
          %441 = vmatpush.msra.mxu0 %v417
          %442 = vmatpush.msra.mxu0 %v416
          %443 = vmatmul.f32.gmra.mxu0 %v422
          %v444 = vpop.f32.mrf.mxu0
          %v445 = vadd.f32 0.0, %v444
          %446 = vmatmul.f32.gmra.mxu0 %v425
          %v447 = vpop.f32.mrf.mxu0
          %v448 = vadd.f32 0.0, %v447
          %449 = vdwg.mxu0
          %450 = vst.msk [vmem:[#allocation2] sm:$0xff] %vm420, %v445
          %451 = vst.msk [vmem:[#allocation2 + $0x8] sm:$0xff] %vm420, %v448
          %v452 = vld [vmem:[#allocation12] sm:$0xff]
          %v453 = vld [vmem:[#allocation12 + $0x8] sm:$0xff]
          %v454 = vld [vmem:[#allocation12 + $0x10] sm:$0xff]
          %v455 = vld [vmem:[#allocation12 + $0x18] sm:$0xff]
          %456 = vmatpush.msra.mxu0 0.0
          %457 = vmatpush.msra.mxu0 0.0
          %458 = vmatpush.msra.mxu0 0.0
          %459 = vmatpush.msra.mxu0 0.0
          %460 = vmatpush.msra.mxu0 0.0
          %461 = vmatpush.msra.mxu0 0.0
          %462 = vmatpush.msra.mxu0 0.0
          %463 = vmatpush.msra.mxu0 0.0
          %464 = vmatpush.msra.mxu0 0.0
          %465 = vmatpush.msra.mxu0 0.0
          %466 = vmatpush.msra.mxu0 0.0
          %467 = vmatpush.msra.mxu0 0.0
          %468 = vmatpush.msra.mxu0 %v455
          %469 = vmatpush.msra.mxu0 %v454
          %470 = vmatpush.msra.mxu0 %v453
          %471 = vmatpush.msra.mxu0 %v452
          %472 = vmatmul.f32.gmra.mxu0 %v422
          %v473 = vpop.f32.mrf.mxu0
          %v474 = vadd.f32 0.0, %v473
          %475 = vmatmul.f32.gmra.mxu0 %v425
          %v476 = vpop.f32.mrf.mxu0
          %v477 = vadd.f32 0.0, %v476
          %478 = vdwg.mxu0
          %479 = vst.msk [vmem:[#allocation3] sm:$0xff] %vm420, %v474
          %480 = vst.msk [vmem:[#allocation3 + $0x8] sm:$0xff] %vm420, %v477
        $region76: #{tpu_custom_call.1} parent=47 // pred_fallthru
          _
        %v481 = vld [vmem:[%s351] sm:$0xff]
        %v482 = vld [vmem:[%s351 + $0x8] sm:$0xff]
        %v483 = vld [vmem:[#allocation9] sm:$0xff]
        %v484 = vld [vmem:[#allocation9 + $0x8] sm:$0xff]
        %v485 = vld [vmem:[#allocation9 + $0x10] sm:$0xff]
        %v486 = vld [vmem:[#allocation9 + $0x18] sm:$0xff]
        %vm487 = vcmask 261120
        %v489 = vsel %vm487, %v481, 0
        %v492 = vsel %vm487, %v482, 0
        %494 = vmatpush.msra.mxu0 0.0
        %495 = vmatpush.msra.mxu0 0.0
        %496 = vmatpush.msra.mxu0 0.0
        %497 = vmatpush.msra.mxu0 0.0
        %498 = vmatpush.msra.mxu0 0.0
        %499 = vmatpush.msra.mxu0 0.0
        %500 = vmatpush.msra.mxu0 0.0
        %501 = vmatpush.msra.mxu0 0.0
        %502 = vmatpush.msra.mxu0 0.0
        %503 = vmatpush.msra.mxu0 0.0
        %504 = vmatpush.msra.mxu0 0.0
        %505 = vmatpush.msra.mxu0 0.0
        %506 = vmatpush.msra.mxu0 %v486
        %507 = vmatpush.msra.mxu0 %v485
        %508 = vmatpush.msra.mxu0 %v484
        %509 = vmatpush.msra.mxu0 %v483
        %510 = vmatmul.f32.gmra.mxu0 %v489
        %v511 = vpop.f32.mrf.mxu0
        %v512 = vadd.f32 0.0, %v511
        %513 = vmatmul.f32.gmra.mxu0 %v492
        %v514 = vpop.f32.mrf.mxu0
        %v515 = vadd.f32 0.0, %v514
        %516 = vdwg.mxu0
        %v517 = vmul.f32 %v512, 0.35355338
        %v518 = vmul.f32 %v515, 0.35355338
        %v519 = vld [vmem:[#allocation2] sm:$0xff]
        %v520 = vld [vmem:[#allocation2 + $0x8] sm:$0xff]
        %v521 = vld [vmem:[#allocation3] sm:$0xff]
        %v522 = vld [vmem:[#allocation3 + $0x8] sm:$0xff]
        %vm523 = vcmask 64512
        %v525 = vsel %vm523, %v517, 0
        %v528 = vsel %vm523, %v518, 0
        %v531 = vsel %vm523, %v519, 0
        %v534 = vsel %vm523, %v520, 0
        %536 = vmatpush.xpose.msra.mxu0 0.0
        %537 = vmatpush.xpose.msra.mxu0 0.0
        %538 = vmatpush.xpose.msra.mxu0 0.0
        %539 = vmatpush.xpose.msra.mxu0 0.0
        %540 = vmatpush.xpose.msra.mxu0 0.0
        %541 = vmatpush.xpose.msra.mxu0 0.0
        %542 = vmatpush.xpose.msra.mxu0 0.0
        %543 = vmatpush.xpose.msra.mxu0 0.0
        %544 = vmatpush.xpose.msra.mxu0 0.0
        %545 = vmatpush.xpose.msra.mxu0 0.0
        %546 = vmatpush.xpose.msra.mxu0 0.0
        %547 = vmatpush.xpose.msra.mxu0 0.0
        %548 = vmatpush.xpose.msra.mxu0 0.0
        %549 = vmatpush.xpose.msra.mxu0 0.0
        %550 = vmatpush.xpose.msra.mxu0 %v534
        %551 = vmatpush.xpose.msra.mxu0 %v531
        %552 = vmatmul.f32.gmra.mxu0 %v525
        %v553 = vpop.f32.mrf.mxu0
        %v554 = vadd.f32 0.0, %v553
        %555 = vmatmul.f32.gmra.mxu0 %v528
        %v556 = vpop.f32.mrf.mxu0
        %v557 = vadd.f32 0.0, %v556
        %558 = vdwg.mxu0
        %vm559 = vcmask 130048
        %v560 = vsel %vm559, %v554, -inf
        %561 = vmax.xlane.f32.xlu0 %v560
        %v562 = vpop.xlane.xlu0 %561
        %v563 = vsel %vm559, %v557, -inf
        %564 = vmax.xlane.f32.xlu0 %v563
        %v565 = vpop.xlane.xlu0 %564
        %v566 = vsub.f32 %v554, %v562
        %v567 = vsub.f32 %v557, %v565
        %v568 = vmul.f32 %v566, 1.442695
        %v569 = vpow.pop %v568
        %v570 = vmul.f32 %v567, 1.442695
        %v571 = vpow.pop %v570
        %v572 = vsel %vm559, %v569, 0.0
        %573 = vadd.xlane.f32.xlu0 %v572
        %v574 = vpop.xlane.xlu0 %573
        %v575 = vsel %vm559, %v571, 0.0
        %576 = vadd.xlane.f32.xlu0 %v575
        %v577 = vpop.xlane.xlu0 %576
        %v578 = vrcp.pop %v574
        %v579 = vrcp.pop %v577
        %v580 = vmul.f32 %v569, %v578
        %v581 = vmul.f32 %v571, %v579
        %v583 = vsel %vm559, %v580, 0
        %v586 = vsel %vm559, %v581, 0
        %588 = vmatpush.msra.mxu0 0.0
        %589 = vmatpush.msra.mxu0 0.0
        %590 = vmatpush.msra.mxu0 0.0
        %591 = vmatpush.msra.mxu0 0.0
        %592 = vmatpush.msra.mxu0 0.0
        %593 = vmatpush.msra.mxu0 0.0
        %594 = vmatpush.msra.mxu0 0.0
        %595 = vmatpush.msra.mxu0 0.0
        %596 = vmatpush.msra.mxu0 0.0
        %597 = vmatpush.msra.mxu0 0.0
        %598 = vmatpush.msra.mxu0 0.0
        %599 = vmatpush.msra.mxu0 0.0
        %600 = vmatpush.msra.mxu0 0.0
        %601 = vmatpush.msra.mxu0 0.0
        %602 = vmatpush.msra.mxu0 %v522
        %603 = vmatpush.msra.mxu0 %v521
        %604 = vmatmul.f32.gmra.mxu0 %v583
        %v605 = vpop.f32.mrf.mxu0
        %v606 = vadd.f32 0.0, %v605
        %607 = vmatmul.f32.gmra.mxu0 %v586
        %v608 = vpop.f32.mrf.mxu0
        %v609 = vadd.f32 0.0, %v608
        %610 = vdwg.mxu0
        %v611 = vld [vmem:[#allocation13] sm:$0xff]
        %612 = vrot.lane.b32.xlu0 %v517, 120
        %v613 = vpop.permute.xlu0 %612
        %614 = vrot.lane.b32.xlu0 %v518, 120
        %v615 = vpop.permute.xlu0 %614
        %616 = vrot.lane.b32.xlu0 %v519, 120
        %v617 = vpop.permute.xlu0 %616
        %618 = vrot.lane.b32.xlu0 %v520, 120
        %v619 = vpop.permute.xlu0 %618
        %v620 = vsel %vm523, %v613, 0
        %v622 = vsel %vm523, %v615, 0
        %v624 = vsel %vm523, %v617, 0
        %v626 = vsel %vm523, %v619, 0
        %628 = vmatpush.xpose.msra.mxu0 0.0
        %629 = vmatpush.xpose.msra.mxu0 0.0
        %630 = vmatpush.xpose.msra.mxu0 0.0
        %631 = vmatpush.xpose.msra.mxu0 0.0
        %632 = vmatpush.xpose.msra.mxu0 0.0
        %633 = vmatpush.xpose.msra.mxu0 0.0
        %634 = vmatpush.xpose.msra.mxu0 0.0
        %635 = vmatpush.xpose.msra.mxu0 0.0
        %636 = vmatpush.xpose.msra.mxu0 0.0
        %637 = vmatpush.xpose.msra.mxu0 0.0
        %638 = vmatpush.xpose.msra.mxu0 0.0
        %639 = vmatpush.xpose.msra.mxu0 0.0
        %640 = vmatpush.xpose.msra.mxu0 0.0
        %641 = vmatpush.xpose.msra.mxu0 0.0
        %642 = vmatpush.xpose.msra.mxu0 %v626
        %643 = vmatpush.xpose.msra.mxu0 %v624
        %644 = vmatmul.f32.gmra.mxu0 %v620
        %v645 = vpop.f32.mrf.mxu0
        %v646 = vadd.f32 0.0, %v645
        %647 = vmatmul.f32.gmra.mxu0 %v622
        %v648 = vpop.f32.mrf.mxu0
        %v649 = vadd.f32 0.0, %v648
        %650 = vdwg.mxu0
        %v651 = vsel %vm559, %v646, -inf
        %652 = vmax.xlane.f32.xlu0 %v651
        %v653 = vpop.xlane.xlu0 %652
        %v654 = vsel %vm559, %v649, -inf
        %655 = vmax.xlane.f32.xlu0 %v654
        %v656 = vpop.xlane.xlu0 %655
        %v657 = vsub.f32 %v646, %v653
        %v658 = vsub.f32 %v649, %v656
        %v659 = vmul.f32 %v657, 1.442695
        %v660 = vpow.pop %v659
        %v661 = vmul.f32 %v658, 1.442695
        %v662 = vpow.pop %v661
        %v663 = vsel %vm559, %v660, 0.0
        %664 = vadd.xlane.f32.xlu0 %v663
        %v665 = vpop.xlane.xlu0 %664
        %v666 = vsel %vm559, %v662, 0.0
        %667 = vadd.xlane.f32.xlu0 %v666
        %v668 = vpop.xlane.xlu0 %667
        %v669 = vrcp.pop %v665
        %v670 = vrcp.pop %v668
        %v671 = vmul.f32 %v660, %v669
        %v672 = vmul.f32 %v662, %v670
        %675 = vrot.lane.b32.xlu0 %v521, 120
        %v676 = vpop.permute.xlu0 %675
        %677 = vrot.lane.b32.xlu0 %v522, 120
        %v678 = vpop.permute.xlu0 %677
        %v682 = vsel %vm559, %v671, 0
        %v685 = vsel %vm559, %v672, 0
        %687 = vmatpush.msra.mxu0 0.0
        %688 = vmatpush.msra.mxu0 0.0
        %689 = vmatpush.msra.mxu0 0.0
        %690 = vmatpush.msra.mxu0 0.0
        %691 = vmatpush.msra.mxu0 0.0
        %692 = vmatpush.msra.mxu0 0.0
        %693 = vmatpush.msra.mxu0 0.0
        %694 = vmatpush.msra.mxu0 0.0
        %695 = vmatpush.msra.mxu0 0.0
        %696 = vmatpush.msra.mxu0 0.0
        %697 = vmatpush.msra.mxu0 0.0
        %698 = vmatpush.msra.mxu0 0.0
        %699 = vmatpush.msra.mxu0 0.0
        %700 = vmatpush.msra.mxu0 0.0
        %701 = vmatpush.msra.mxu0 %v678
        %702 = vmatpush.msra.mxu0 %v676
        %703 = vmatmul.f32.gmra.mxu0 %v682
        %v704 = vpop.f32.mrf.mxu0
        %v705 = vadd.f32 0.0, %v704
        %706 = vmatmul.f32.gmra.mxu0 %v685
        %v707 = vpop.f32.mrf.mxu0
        %v708 = vadd.f32 0.0, %v707
        %709 = vdwg.mxu0
        %v710 = vld [vmem:[#allocation13 + $0x8] sm:$0xff]
        %v712 = vsel %vm523, %v705, 0
        %v715 = vsel %vm523, %v708, 0
        %717 = vmatpush.msra.mxu0 0.0
        %718 = vmatpush.msra.mxu0 0.0
        %719 = vmatpush.msra.mxu0 0.0
        %720 = vmatpush.msra.mxu0 0.0
        %721 = vmatpush.msra.mxu0 0.0
        %722 = vmatpush.msra.mxu0 0.0
        %723 = vmatpush.msra.mxu0 0.0
        %724 = vmatpush.msra.mxu0 0.0
        %725 = vmatpush.msra.mxu0 0.0
        %726 = vmatpush.msra.mxu0 0.0
        %727 = vmatpush.msra.mxu0 0.0
        %728 = vmatpush.msra.mxu0 0.0
        %729 = vmatpush.msra.mxu0 0.0
        %730 = vmatpush.msra.mxu0 0.0
        %731 = vmatpush.msra.mxu0 0.0
        %732 = vmatpush.msra.mxu0 %v710
        %733 = vmatmul.f32.gmra.mxu0 %v712
        %v734 = vpop.f32.mrf.mxu0
        %v735 = vadd.f32 0.0, %v734
        %736 = vmatmul.f32.gmra.mxu0 %v715
        %v737 = vpop.f32.mrf.mxu0
        %v738 = vadd.f32 0.0, %v737
        %739 = vdwg.mxu0
        %v741 = vsel %vm523, %v606, 0
        %v744 = vsel %vm523, %v609, 0
        %746 = vmatpush.msra.mxu0 0.0
        %747 = vmatpush.msra.mxu0 0.0
        %748 = vmatpush.msra.mxu0 0.0
        %749 = vmatpush.msra.mxu0 0.0
        %750 = vmatpush.msra.mxu0 0.0
        %751 = vmatpush.msra.mxu0 0.0
        %752 = vmatpush.msra.mxu0 0.0
        %753 = vmatpush.msra.mxu0 0.0
        %754 = vmatpush.msra.mxu0 0.0
        %755 = vmatpush.msra.mxu0 0.0
        %756 = vmatpush.msra.mxu0 0.0
        %757 = vmatpush.msra.mxu0 0.0
        %758 = vmatpush.msra.mxu0 0.0
        %759 = vmatpush.msra.mxu0 0.0
        %760 = vmatpush.msra.mxu0 0.0
        %761 = vmatpush.msra.mxu0 %v611
        %762 = vmatmul.f32.gmra.mxu0 %v741
        %v763 = vpop.f32.mrf.mxu0
        %v764 = vadd.f32 %v735, %v763
        %765 = vmatmul.f32.gmra.mxu0 %v744
        %v766 = vpop.f32.mrf.mxu0
        %v767 = vadd.f32 %v738, %v766
        %768 = vdwg.mxu0
        %769 = vrot.lane.b32.xlu0 %v517, 112
        %v770 = vpop.permute.xlu0 %769
        %771 = vrot.lane.b32.xlu0 %v518, 112
        %v772 = vpop.permute.xlu0 %771
        %773 = vrot.lane.b32.xlu0 %v519, 112
        %v774 = vpop.permute.xlu0 %773
        %775 = vrot.lane.b32.xlu0 %v520, 112
        %v776 = vpop.permute.xlu0 %775
        %v777 = vsel %vm523, %v770, 0
        %v779 = vsel %vm523, %v772, 0
        %v781 = vsel %vm523, %v774, 0
        %v783 = vsel %vm523, %v776, 0
        %785 = vmatpush.xpose.msra.mxu0 0.0
        %786 = vmatpush.xpose.msra.mxu0 0.0
        %787 = vmatpush.xpose.msra.mxu0 0.0
        %788 = vmatpush.xpose.msra.mxu0 0.0
        %789 = vmatpush.xpose.msra.mxu0 0.0
        %790 = vmatpush.xpose.msra.mxu0 0.0
        %791 = vmatpush.xpose.msra.mxu0 0.0
        %792 = vmatpush.xpose.msra.mxu0 0.0
        %793 = vmatpush.xpose.msra.mxu0 0.0
        %794 = vmatpush.xpose.msra.mxu0 0.0
        %795 = vmatpush.xpose.msra.mxu0 0.0
        %796 = vmatpush.xpose.msra.mxu0 0.0
        %797 = vmatpush.xpose.msra.mxu0 0.0
        %798 = vmatpush.xpose.msra.mxu0 0.0
        %799 = vmatpush.xpose.msra.mxu0 %v783
        %800 = vmatpush.xpose.msra.mxu0 %v781
        %801 = vmatmul.f32.gmra.mxu0 %v777
        %v802 = vpop.f32.mrf.mxu0
        %v803 = vadd.f32 0.0, %v802
        %804 = vmatmul.f32.gmra.mxu0 %v779
        %v805 = vpop.f32.mrf.mxu0
        %v806 = vadd.f32 0.0, %v805
        %807 = vdwg.mxu0
        %v808 = vsel %vm559, %v803, -inf
        %809 = vmax.xlane.f32.xlu0 %v808
        %v810 = vpop.xlane.xlu0 %809
        %v811 = vsel %vm559, %v806, -inf
        %812 = vmax.xlane.f32.xlu0 %v811
        %v813 = vpop.xlane.xlu0 %812
        %v814 = vsub.f32 %v803, %v810
        %v815 = vsub.f32 %v806, %v813
        %v816 = vmul.f32 %v814, 1.442695
        %v817 = vpow.pop %v816
        %v818 = vmul.f32 %v815, 1.442695
        %v819 = vpow.pop %v818
        %v820 = vsel %vm559, %v817, 0.0
        %821 = vadd.xlane.f32.xlu0 %v820
        %v822 = vpop.xlane.xlu0 %821
        %v823 = vsel %vm559, %v819, 0.0
        %824 = vadd.xlane.f32.xlu0 %v823
        %v825 = vpop.xlane.xlu0 %824
        %v826 = vrcp.pop %v822
        %v827 = vrcp.pop %v825
        %v828 = vmul.f32 %v817, %v826
        %v829 = vmul.f32 %v819, %v827
        %830 = vrot.lane.b32.xlu0 %v521, 112
        %v831 = vpop.permute.xlu0 %830
        %832 = vrot.lane.b32.xlu0 %v522, 112
        %v833 = vpop.permute.xlu0 %832
        %v837 = vsel %vm559, %v828, 0
        %v840 = vsel %vm559, %v829, 0
        %842 = vmatpush.msra.mxu0 0.0
        %843 = vmatpush.msra.mxu0 0.0
        %844 = vmatpush.msra.mxu0 0.0
        %845 = vmatpush.msra.mxu0 0.0
        %846 = vmatpush.msra.mxu0 0.0
        %847 = vmatpush.msra.mxu0 0.0
        %848 = vmatpush.msra.mxu0 0.0
        %849 = vmatpush.msra.mxu0 0.0
        %850 = vmatpush.msra.mxu0 0.0
        %851 = vmatpush.msra.mxu0 0.0
        %852 = vmatpush.msra.mxu0 0.0
        %853 = vmatpush.msra.mxu0 0.0
        %854 = vmatpush.msra.mxu0 0.0
        %855 = vmatpush.msra.mxu0 0.0
        %856 = vmatpush.msra.mxu0 %v833
        %857 = vmatpush.msra.mxu0 %v831
        %858 = vmatmul.f32.gmra.mxu0 %v837
        %v859 = vpop.f32.mrf.mxu0
        %v860 = vadd.f32 0.0, %v859
        %861 = vmatmul.f32.gmra.mxu0 %v840
        %v862 = vpop.f32.mrf.mxu0
        %v863 = vadd.f32 0.0, %v862
        %864 = vdwg.mxu0
        %v865 = vld [vmem:[#allocation13 + $0x10] sm:$0xff]
        %v867 = vsel %vm523, %v860, 0
        %v870 = vsel %vm523, %v863, 0
        %872 = vmatpush.msra.mxu0 0.0
        %873 = vmatpush.msra.mxu0 0.0
        %874 = vmatpush.msra.mxu0 0.0
        %875 = vmatpush.msra.mxu0 0.0
        %876 = vmatpush.msra.mxu0 0.0
        %877 = vmatpush.msra.mxu0 0.0
        %878 = vmatpush.msra.mxu0 0.0
        %879 = vmatpush.msra.mxu0 0.0
        %880 = vmatpush.msra.mxu0 0.0
        %881 = vmatpush.msra.mxu0 0.0
        %882 = vmatpush.msra.mxu0 0.0
        %883 = vmatpush.msra.mxu0 0.0
        %884 = vmatpush.msra.mxu0 0.0
        %885 = vmatpush.msra.mxu0 0.0
        %886 = vmatpush.msra.mxu0 0.0
        %887 = vmatpush.msra.mxu0 %v865
        %888 = vmatmul.f32.gmra.mxu0 %v867
        %v889 = vpop.f32.mrf.mxu0
        %v890 = vadd.f32 0.0, %v889
        %891 = vmatmul.f32.gmra.mxu0 %v870
        %v892 = vpop.f32.mrf.mxu0
        %v893 = vadd.f32 0.0, %v892
        %894 = vdwg.mxu0
        %v895 = vadd.f32 %v764, %v890
        %v896 = vadd.f32 %v767, %v893
        %897 = vrot.lane.b32.xlu0 %v517, 104
        %v898 = vpop.permute.xlu0 %897
        %899 = vrot.lane.b32.xlu0 %v518, 104
        %v900 = vpop.permute.xlu0 %899
        %901 = vrot.lane.b32.xlu0 %v519, 104
        %v902 = vpop.permute.xlu0 %901
        %903 = vrot.lane.b32.xlu0 %v520, 104
        %v904 = vpop.permute.xlu0 %903
        %v905 = vsel %vm523, %v898, 0
        %v907 = vsel %vm523, %v900, 0
        %v909 = vsel %vm523, %v902, 0
        %v911 = vsel %vm523, %v904, 0
        %913 = vmatpush.xpose.msra.mxu0 0.0
        %914 = vmatpush.xpose.msra.mxu0 0.0
        %915 = vmatpush.xpose.msra.mxu0 0.0
        %916 = vmatpush.xpose.msra.mxu0 0.0
        %917 = vmatpush.xpose.msra.mxu0 0.0
        %918 = vmatpush.xpose.msra.mxu0 0.0
        %919 = vmatpush.xpose.msra.mxu0 0.0
        %920 = vmatpush.xpose.msra.mxu0 0.0
        %921 = vmatpush.xpose.msra.mxu0 0.0
        %922 = vmatpush.xpose.msra.mxu0 0.0
        %923 = vmatpush.xpose.msra.mxu0 0.0
        %924 = vmatpush.xpose.msra.mxu0 0.0
        %925 = vmatpush.xpose.msra.mxu0 0.0
        %926 = vmatpush.xpose.msra.mxu0 0.0
        %927 = vmatpush.xpose.msra.mxu0 %v911
        %928 = vmatpush.xpose.msra.mxu0 %v909
        %929 = vmatmul.f32.gmra.mxu0 %v905
        %v930 = vpop.f32.mrf.mxu0
        %v931 = vadd.f32 0.0, %v930
        %932 = vmatmul.f32.gmra.mxu0 %v907
        %v933 = vpop.f32.mrf.mxu0
        %v934 = vadd.f32 0.0, %v933
        %935 = vdwg.mxu0
        %v936 = vsel %vm559, %v931, -inf
        %937 = vmax.xlane.f32.xlu0 %v936
        %v938 = vpop.xlane.xlu0 %937
        %v939 = vsel %vm559, %v934, -inf
        %940 = vmax.xlane.f32.xlu0 %v939
        %v941 = vpop.xlane.xlu0 %940
        %v942 = vsub.f32 %v931, %v938
        %v943 = vsub.f32 %v934, %v941
        %v944 = vmul.f32 %v942, 1.442695
        %v945 = vpow.pop %v944
        %v946 = vmul.f32 %v943, 1.442695
        %v947 = vpow.pop %v946
        %v948 = vsel %vm559, %v945, 0.0
        %949 = vadd.xlane.f32.xlu0 %v948
        %v950 = vpop.xlane.xlu0 %949
        %v951 = vsel %vm559, %v947, 0.0
        %952 = vadd.xlane.f32.xlu0 %v951
        %v953 = vpop.xlane.xlu0 %952
        %v954 = vrcp.pop %v950
        %v955 = vrcp.pop %v953
        %v956 = vmul.f32 %v945, %v954
        %v957 = vmul.f32 %v947, %v955
        %958 = vrot.lane.b32.xlu0 %v521, 104
        %v959 = vpop.permute.xlu0 %958
        %960 = vrot.lane.b32.xlu0 %v522, 104
        %v961 = vpop.permute.xlu0 %960
        %v965 = vsel %vm559, %v956, 0
        %v968 = vsel %vm559, %v957, 0
        %970 = vmatpush.msra.mxu0 0.0
        %971 = vmatpush.msra.mxu0 0.0
        %972 = vmatpush.msra.mxu0 0.0
        %973 = vmatpush.msra.mxu0 0.0
        %974 = vmatpush.msra.mxu0 0.0
        %975 = vmatpush.msra.mxu0 0.0
        %976 = vmatpush.msra.mxu0 0.0
        %977 = vmatpush.msra.mxu0 0.0
        %978 = vmatpush.msra.mxu0 0.0
        %979 = vmatpush.msra.mxu0 0.0
        %980 = vmatpush.msra.mxu0 0.0
        %981 = vmatpush.msra.mxu0 0.0
        %982 = vmatpush.msra.mxu0 0.0
        %983 = vmatpush.msra.mxu0 0.0
        %984 = vmatpush.msra.mxu0 %v961
        %985 = vmatpush.msra.mxu0 %v959
        %986 = vmatmul.f32.gmra.mxu0 %v965
        %v987 = vpop.f32.mrf.mxu0
        %v988 = vadd.f32 0.0, %v987
        %989 = vmatmul.f32.gmra.mxu0 %v968
        %v990 = vpop.f32.mrf.mxu0
        %v991 = vadd.f32 0.0, %v990
        %992 = vdwg.mxu0
        %v993 = vld [vmem:[#allocation13 + $0x18] sm:$0xff]
        %v995 = vsel %vm523, %v988, 0
        %v998 = vsel %vm523, %v991, 0
        %1000 = vmatpush.msra.mxu0 0.0
        %1001 = vmatpush.msra.mxu0 0.0
        %1002 = vmatpush.msra.mxu0 0.0
        %1003 = vmatpush.msra.mxu0 0.0
        %1004 = vmatpush.msra.mxu0 0.0
        %1005 = vmatpush.msra.mxu0 0.0
        %1006 = vmatpush.msra.mxu0 0.0
        %1007 = vmatpush.msra.mxu0 0.0
        %1008 = vmatpush.msra.mxu0 0.0
        %1009 = vmatpush.msra.mxu0 0.0
        %1010 = vmatpush.msra.mxu0 0.0
        %1011 = vmatpush.msra.mxu0 0.0
        %1012 = vmatpush.msra.mxu0 0.0
        %1013 = vmatpush.msra.mxu0 0.0
        %1014 = vmatpush.msra.mxu0 0.0
        %1015 = vmatpush.msra.mxu0 %v993
        %1016 = vmatmul.f32.gmra.mxu0 %v995
        %v1017 = vpop.f32.mrf.mxu0
        %v1018 = vadd.f32 0.0, %v1017
        %1019 = vmatmul.f32.gmra.mxu0 %v998
        %v1020 = vpop.f32.mrf.mxu0
        %v1021 = vadd.f32 0.0, %v1020
        %1022 = vdwg.mxu0
        %v1023 = vadd.f32 %v895, %v1018
        %v1024 = vadd.f32 %v896, %v1021
        %v1025 = vld [vmem:[%s6] sm:$0x1]
        %v1027 = vperm.slane %v1025, 0
        %v1029 = vadd.f32 %v1023, %v1027
        %v1030 = vadd.f32 %v1024, %v1027
        %1031 = vst.msk [vmem:[%s407] sm:$0xff] %vm487, %v1029
        %1032 = vst.msk [vmem:[%s407 + $0x8] sm:$0xff] %vm487, %v1030
        %s1033 = sand.u32 %s208, 1
        %s1034 = scalar_lea.sflag [#allocation6], %s1033
        %s1035 = sand.u32 %s208, 1
        %s1036 = smul.addr %s1035, 16
        %s1037 = scalar_lea.vmem [#allocation15], %s1036
        // Predicated region
        $region77: #{tpu_custom_call.1} parent=47 // pred_check
          %p1038 = pneg %p218
        $region78: #{tpu_custom_call.1} parent=47 // pred_check_branch
          %1040 = sbr.rel (%p1038) target = $region80
        $region79: #{tpu_custom_call.1} parent=47 // pred_region
          %s1041 = smul.u32 2, %s32
          %1043 = vsyncadd %s1034, 0
          %s1044 = smul.addr %s31, 4
          %s1045 = sadd.s32 %s1041, %s1044
          %s1046 = smul.addr %s1045, 8
          %s1047 = scalar_lea.hbm %s7, %s1046
          %s1048 = sshll.u32 %s1037, 4
          %s1049 = int_to_ptr.vmem [resolvable:$true] %s1048
          %s1050 = sshll.u32 %s1047, 4
          %s1051 = int_to_ptr.hbm [resolvable:$true] %s1050
          %1056 = dma.vmem_to_hbm [thread:$0]  %s1049, 256, %s1051, %s1034, 128, 128, 8
        $region80: #{tpu_custom_call.1} parent=47 // pred_fallthru
          _
      $region48: #{tpu_custom_call.1} parent=5 // pred_fallthru
        _
      %p1057 = scmp.le.s32.totalorder 2, %s22
      // Predicated region
      $region81: #{tpu_custom_call.1} parent=5 // pred_check
        %p1058 = pneg %p1057
      $region82: #{tpu_custom_call.1} parent=5 // pred_check_branch
        %1060 = sbr.rel (%p1058) target = $region84
      $region83: #{tpu_custom_call.1} parent=5 // pred_region
        %s1061 = ssub.s32 %s22, 2
        // Predicated region
        $region85: #{tpu_custom_call.1} parent=83 // pred_check
          %p1062 = pneg %p224
        $region86: #{tpu_custom_call.1} parent=83 // pred_check_branch
          %1064 = sbr.rel (%p1062) target = $region88
        $region87: #{tpu_custom_call.1} parent=83 // pred_region
          %s1065 = sand.u32 %s209, 1
          %s1066 = scalar_lea.sflag [#allocation6], %s1065
          %s1067 = sand.u32 %s209, 1
          %s1068 = smul.addr %s1067, 16
          %s1069 = scalar_lea.vmem [#allocation15], %s1068
          %1071 = dma.done %s1066, 256
        $region88: #{tpu_custom_call.1} parent=83 // pred_fallthru
          _
      $region84: #{tpu_custom_call.1} parent=5 // pred_fallthru
        _
    $region6: #{tpu_custom_call.1} parent=1 // loop_footer
      %s26 = sadd.s32 1, %s22
    $region7: #{tpu_custom_call.1} parent=1 // loop_footer_branch
      %21 = sbr.rel target = $region3
    $region8: #{tpu_custom_call.1} parent=1 // loop_exit
      _
    %1072 = vsyncpa [#allocation5], 1
    %s1073 = scalar_lea.sflag [#allocation5], 1
    %1074 = vsyncpa %s1073, 1
    %1075 = vsyncpa [#allocation8], 1
    %1076 = vsyncpa [#allocation11], 1
    %1077 = vsyncpa [#allocation14], 1
    %1078 = vsyncpa [#allocation6], 1
    %s1079 = scalar_lea.sflag [#allocation6], 1
    %1080 = vsyncpa %s1079, 1

// kernel: tpu_custom_call.1
$region0: #{tpu_custom_call.1}
  #allocation0 [shape = 'u32[]', space=smem, size = 0x4, offset = 0x4, fixed_abs, tag = 'smem constant byte address 0x4 - core index']
  #allocation1 [shape = 'u32[72,128]{1,0:T(1,128)}', space=vmem, size = 0x9000, scoped, tag = 'internal scratch']
  #allocation2 [shape = 'f32[16,32]{1,0:T(8,128)}', space=vmem, size = 0x2000, scoped, tag = 'scratch operand']
  #allocation3 [shape = 'f32[16,32]{1,0:T(8,128)}', space=vmem, size = 0x2000, scoped, tag = 'scratch operand']
  %s0 = inlined_call_operand.hbm [shape: f32[2,32,32], index: 0, kind: input, shape index: {}]
  %s1 = inlined_call_operand.hbm [shape: f32[2,16,32], index: 1, kind: input, shape index: {}]
  %s2 = inlined_call_operand.hbm [shape: f32[32,32], index: 2, kind: input, shape index: {}]
  %s3 = inlined_call_operand.hbm [shape: f32[32,32], index: 3, kind: input, shape index: {}]
  %s4 = inlined_call_operand.hbm [shape: f32[32,32], index: 4, kind: input, shape index: {}]
  %s5 = inlined_call_operand.hbm [shape: f32[32,32], index: 5, kind: input, shape index: {}]
  %s6 = inlined_call_operand.vmem [shape: f32[1,32], index: 6, kind: input, shape index: {}]
  %s7 = inlined_call_operand.hbm [shape: f32[2,32,32], index: 7, kind: output, shape index: {}]
  %s8 = sld [smem:[#allocation0]]
  $region89: #{tpu_custom_call.1} parent=0
    _
  %s10 = ssub.s32 1, %s8
  %s11 = scalar_select 0, %s10, %s8
  $region1: #{tpu_custom_call.1} parent=0
    #allocation4 [shape = 'u8[16384]{0}', space=vmem, size = 0x4000, scoped, tag = 'input window, operand 0']
    #allocation5 [shape = 's32[2]{0}', space=sflag, size = 0x8, scoped, tag = 'scoped memory for tpu_custom_call.1']
    #allocation6 [shape = 's32[2]{0}', space=sflag, size = 0x8, scoped, tag = 'scoped memory for tpu_custom_call.1']
    #allocation7 [shape = 'u8[16384]{0}', space=vmem, size = 0x4000, scoped, tag = 'input window, operand 1']
    #allocation8 [shape = 's32[2]{0}', space=sflag, size = 0x8, scoped, tag = 'scoped memory for tpu_custom_call.1']
    #allocation9 [shape = 'u8[16384]{0}', space=vmem, size = 0x4000, scoped, tag = 'input window, operand 2, single buffered']
    #allocation10 [shape = 'u8[16384]{0}', space=vmem, size = 0x4000, scoped, tag = 'input window, operand 3, single buffered']
    #allocation11 [shape = 's32[1]{0}', space=sflag, size = 0x4, scoped, tag = 'scoped memory for tpu_custom_call.1']
    #allocation12 [shape = 'u8[16384]{0}', space=vmem, size = 0x4000, scoped, tag = 'input window, operand 4, single buffered']
    #allocation13 [shape = 'u8[16384]{0}', space=vmem, size = 0x4000, scoped, tag = 'input window, operand 5, single buffered']
    #allocation14 [shape = 's32[1]{0}', space=sflag, size = 0x4, scoped, tag = 'scoped memory for tpu_custom_call.1']
    #allocation15 [shape = 'u8[16384]{0}', space=vmem, size = 0x4000, scoped, tag = 'output window, operand 0']
    %12 = vsyncpa [#allocation5], 0
    %s13 = scalar_lea.sflag [#allocation5], 1
    %14 = vsyncpa %s13, 0
    %15 = vsyncpa [#allocation8], 0
    %s16 = scalar_lea.sflag [#allocation8], 1
    %17 = vsyncpa %s16, 0
    %18 = vsyncpa [#allocation11], 0
    %19 = vsyncpa [#allocation14], 0
    %20 = vsyncpa [#allocation6], 0
    %s21 = scalar_lea.sflag [#allocation6], 1
    %22 = vsyncpa %s21, 0
    loop: start=0, step=1, limit=6
    $region2: #{tpu_custom_call.1} parent=1 // loop_pre_header
      _
    $region3: #{tpu_custom_call.1} parent=1 // loop_header
      %s24 = sphi 0, %s28
      %p25 = scmp.ge.s32.totalorder %s24, 6
      %s31 = sphi 0, %s43
      %s32 = sphi 0, %s39
      %s33 = sphi 0, %s31
      %s34 = sphi 0, %s32
      %s35 = sphi 0, %s33
      %s36 = sphi 0, %s34
      %s48 = sphi 0, %s50
      %s51 = sphi 0, %s48
      %s52 = sphi 0, %s51
      %s68 = sphi 0, %s52
      %s74 = sphi 0, %s76
      %s77 = sphi 0, %s74
      %s78 = sphi 0, %s77
      %s94 = sphi 0, %s78
      %s98 = sphi 0, %s98
      %s100 = sphi 0, %s98
      %s101 = sphi 0, %s100
      %s115 = sphi 0, %s101
      %s119 = sphi 0, %s119
      %s121 = sphi 0, %s119
      %s122 = sphi 0, %s121
      %s136 = sphi 0, %s122
      %s140 = sphi 0, %s140
      %s142 = sphi 0, %s140
      %s143 = sphi 0, %s142
      %s157 = sphi 0, %s143
      %s161 = sphi 0, %s161
      %s163 = sphi 0, %s161
      %s164 = sphi 0, %s163
      %s178 = sphi 0, %s164
      %s182 = sphi 0, %s182
      %s184 = sphi 0, %s182
      %s185 = sphi 0, %s184
      %s199 = sphi 0, %s185
      %s207 = sphi 0, %s209
      %s210 = sphi 0, %s207
      %s211 = sphi 0, %s210
      %s227 = sphi 0, %s211
    $region4: #{tpu_custom_call.1} parent=1 // loop_header_branch
      %27 = sbr.rel (%p25) target = $region8
    $region5: #{tpu_custom_call.1} parent=1 // loop_body
      %s29 = ssub.s32 %s24, 1
      %s30 = ssub.s32 %s24, 2
      %s37 = sadd.s32 1, %s32
      %p38 = scmp.ge.s32.totalorder %s37, 2
      %s39 = scalar_select %p38, 0, %s37
      %s40 = sadd.s32 1, %s31
      %s41 = scalar_select %p38, %s40, %s31
      %p42 = scmp.ge.s32.totalorder %s41, 2
      %s43 = scalar_select %p42, 0, %s41
      %s44 = ssub.s32 %s31, %s43
      %s45 = ssub.s32 %s32, %s39
      %s46 = sor.u32 %s44, %s45
      %p47 = scmp.eq.s32.totalorder %s46, 0
      %s49 = sadd.s32 %s48, 1
      %s50 = scalar_select %p47, %s48, %s49
      %p53 = pneg %p47
      %p54 = scmp.eq.s32.totalorder %s24, 3
      %p55 = por %p53, %p54
      %p56 = scmp.ne.s32.totalorder %s48, %s51
      %p57 = scmp.eq.s32.totalorder %s24, 0
      %p58 = por %p56, %p57
      %p59 = scmp.ne.s32.totalorder %s48, %s51
      %p60 = scmp.eq.s32.totalorder %s29, 3
      %p61 = por %p59, %p60
      %p62 = scmp.ne.s32.totalorder %s51, %s52
      %p63 = scmp.eq.s32.totalorder %s29, 0
      %p64 = por %p62, %p63
      %p65 = scmp.ne.s32.totalorder %s51, %s52
      %p66 = scmp.eq.s32.totalorder %s30, 3
      %p67 = por %p65, %p66
      %p69 = scmp.ne.s32.totalorder %s52, %s68
      %p70 = scmp.eq.s32.totalorder %s30, 0
      %p71 = por %p69, %p70
      %s72 = ssub.s32 %s31, %s43
      %p73 = scmp.eq.s32.totalorder %s72, 0
      %s75 = sadd.s32 %s74, 1
      %s76 = scalar_select %p73, %s74, %s75
      %p79 = pneg %p73
      %p80 = scmp.eq.s32.totalorder %s24, 3
      %p81 = por %p79, %p80
      %p82 = scmp.ne.s32.totalorder %s74, %s77
      %p83 = scmp.eq.s32.totalorder %s24, 0
      %p84 = por %p82, %p83
      %p85 = scmp.ne.s32.totalorder %s74, %s77
      %p86 = scmp.eq.s32.totalorder %s29, 3
      %p87 = por %p85, %p86
      %p88 = scmp.ne.s32.totalorder %s77, %s78
      %p89 = scmp.eq.s32.totalorder %s29, 0
      %p90 = por %p88, %p89
      %p91 = scmp.ne.s32.totalorder %s77, %s78
      %p92 = scmp.eq.s32.totalorder %s30, 3
      %p93 = por %p91, %p92
      %p95 = scmp.ne.s32.totalorder %s78, %s94
      %p96 = scmp.eq.s32.totalorder %s30, 0
      %p97 = por %p95, %p96
      %s99 = sadd.s32 %s98, 1
      %p102 = scmp.eq.s32.totalorder %s24, 3
      %p103 = scmp.ne.s32.totalorder %s98, %s100
      %p104 = scmp.eq.s32.totalorder %s24, 0
      %p105 = por %p103, %p104
      %p106 = scmp.ne.s32.totalorder %s98, %s100
      %p107 = scmp.eq.s32.totalorder %s29, 3
      %p108 = por %p106, %p107
      %p109 = scmp.ne.s32.totalorder %s100, %s101
      %p110 = scmp.eq.s32.totalorder %s29, 0
      %p111 = por %p109, %p110
      %p112 = scmp.ne.s32.totalorder %s100, %s101
      %p113 = scmp.eq.s32.totalorder %s30, 3
      %p114 = por %p112, %p113
      %p116 = scmp.ne.s32.totalorder %s101, %s115
      %p117 = scmp.eq.s32.totalorder %s30, 0
      %p118 = por %p116, %p117
      %s120 = sadd.s32 %s119, 1
      %p123 = scmp.eq.s32.totalorder %s24, 3
      %p124 = scmp.ne.s32.totalorder %s119, %s121
      %p125 = scmp.eq.s32.totalorder %s24, 0
      %p126 = por %p124, %p125
      %p127 = scmp.ne.s32.totalorder %s119, %s121
      %p128 = scmp.eq.s32.totalorder %s29, 3
      %p129 = por %p127, %p128
      %p130 = scmp.ne.s32.totalorder %s121, %s122
      %p131 = scmp.eq.s32.totalorder %s29, 0
      %p132 = por %p130, %p131
      %p133 = scmp.ne.s32.totalorder %s121, %s122
      %p134 = scmp.eq.s32.totalorder %s30, 3
      %p135 = por %p133, %p134
      %p137 = scmp.ne.s32.totalorder %s122, %s136
      %p138 = scmp.eq.s32.totalorder %s30, 0
      %p139 = por %p137, %p138
      %s141 = sadd.s32 %s140, 1
      %p144 = scmp.eq.s32.totalorder %s24, 3
      %p145 = scmp.ne.s32.totalorder %s140, %s142
      %p146 = scmp.eq.s32.totalorder %s24, 0
      %p147 = por %p145, %p146
      %p148 = scmp.ne.s32.totalorder %s140, %s142
      %p149 = scmp.eq.s32.totalorder %s29, 3
      %p150 = por %p148, %p149
      %p151 = scmp.ne.s32.totalorder %s142, %s143
      %p152 = scmp.eq.s32.totalorder %s29, 0
      %p153 = por %p151, %p152
      %p154 = scmp.ne.s32.totalorder %s142, %s143
      %p155 = scmp.eq.s32.totalorder %s30, 3
      %p156 = por %p154, %p155
      %p158 = scmp.ne.s32.totalorder %s143, %s157
      %p159 = scmp.eq.s32.totalorder %s30, 0
      %p160 = por %p158, %p159
      %s162 = sadd.s32 %s161, 1
      %p165 = scmp.eq.s32.totalorder %s24, 3
      %p166 = scmp.ne.s32.totalorder %s161, %s163
      %p167 = scmp.eq.s32.totalorder %s24, 0
      %p168 = por %p166, %p167
      %p169 = scmp.ne.s32.totalorder %s161, %s163
      %p170 = scmp.eq.s32.totalorder %s29, 3
      %p171 = por %p169, %p170
      %p172 = scmp.ne.s32.totalorder %s163, %s164
      %p173 = scmp.eq.s32.totalorder %s29, 0
      %p174 = por %p172, %p173
      %p175 = scmp.ne.s32.totalorder %s163, %s164
      %p176 = scmp.eq.s32.totalorder %s30, 3
      %p177 = por %p175, %p176
      %p179 = scmp.ne.s32.totalorder %s164, %s178
      %p180 = scmp.eq.s32.totalorder %s30, 0
      %p181 = por %p179, %p180
      %s183 = sadd.s32 %s182, 1
      %p186 = scmp.eq.s32.totalorder %s24, 3
      %p187 = scmp.ne.s32.totalorder %s182, %s184
      %p188 = scmp.eq.s32.totalorder %s24, 0
      %p189 = por %p187, %p188
      %p190 = scmp.ne.s32.totalorder %s182, %s184
      %p191 = scmp.eq.s32.totalorder %s29, 3
      %p192 = por %p190, %p191
      %p193 = scmp.ne.s32.totalorder %s184, %s185
      %p194 = scmp.eq.s32.totalorder %s29, 0
      %p195 = por %p193, %p194
      %p196 = scmp.ne.s32.totalorder %s184, %s185
      %p197 = scmp.eq.s32.totalorder %s30, 3
      %p198 = por %p196, %p197
      %p200 = scmp.ne.s32.totalorder %s185, %s199
      %p201 = scmp.eq.s32.totalorder %s30, 0
      %p202 = por %p200, %p201
      %s203 = ssub.s32 %s31, %s43
      %s204 = ssub.s32 %s32, %s39
      %s205 = sor.u32 %s203, %s204
      %p206 = scmp.eq.s32.totalorder %s205, 0
      %s208 = sadd.s32 %s207, 1
      %s209 = scalar_select %p206, %s207, %s208
      %p212 = pneg %p206
      %p213 = scmp.eq.s32.totalorder %s24, 3
      %p214 = por %p212, %p213
      %p215 = scmp.ne.s32.totalorder %s207, %s210
      %p216 = scmp.eq.s32.totalorder %s24, 0
      %p217 = por %p215, %p216
      %p218 = scmp.ne.s32.totalorder %s207, %s210
      %p219 = scmp.eq.s32.totalorder %s29, 3
      %p220 = por %p218, %p219
      %p221 = scmp.ne.s32.totalorder %s210, %s211
      %p222 = scmp.eq.s32.totalorder %s29, 0
      %p223 = por %p221, %p222
      %p224 = scmp.ne.s32.totalorder %s210, %s211
      %p225 = scmp.eq.s32.totalorder %s30, 3
      %p226 = por %p224, %p225
      %p228 = scmp.ne.s32.totalorder %s211, %s227
      %p229 = scmp.eq.s32.totalorder %s30, 0
      %p230 = por %p228, %p229
      %p231 = scmp.le.s32.totalorder 1, %s24
      %p232 = scmp.lt.s32.totalorder %s24, 5
      %p233 = pnand %p231, %p232
      %p234 = pneg %p233
      // Predicated region
      $region9: #{tpu_custom_call.1} parent=5 // pred_check
        _
      $region10: #{tpu_custom_call.1} parent=5 // pred_check_branch
        %236 = sbr.rel (%p233) target = $region12
      $region11: #{tpu_custom_call.1} parent=5 // pred_region
        %s237 = ssub.s32 %s24, 1
        // Predicated region
        $region13: #{tpu_custom_call.1} parent=11 // pred_check
          %p238 = pneg %p111
        $region14: #{tpu_custom_call.1} parent=11 // pred_check_branch
          %240 = sbr.rel (%p238) target = $region16
        $region15: #{tpu_custom_call.1} parent=11 // pred_region
          %242 = vsyncadd [#allocation8], 0
          %s243 = sshll.u32 %s2, 4
          %s244 = int_to_ptr.hbm [resolvable:$true] %s243
          %s245 = sshll.u32 [#allocation9], 4
          %s246 = int_to_ptr.vmem [resolvable:$true] %s245
          %251 = dma.hbm_to_vmem [thread:$0]  %s244, 512, %s246, [#allocation8], 128, 128, 8
        $region16: #{tpu_custom_call.1} parent=11 // pred_fallthru
          _
        // Predicated region
        $region17: #{tpu_custom_call.1} parent=11 // pred_check
          %p252 = pneg %p132
        $region18: #{tpu_custom_call.1} parent=11 // pred_check_branch
          %254 = sbr.rel (%p252) target = $region20
        $region19: #{tpu_custom_call.1} parent=11 // pred_region
          %256 = vsyncadd [#allocation11], 0
          %s257 = sshll.u32 %s3, 4
          %s258 = int_to_ptr.hbm [resolvable:$true] %s257
          %s259 = sshll.u32 [#allocation10], 4
          %s260 = int_to_ptr.vmem [resolvable:$true] %s259
          %265 = dma.hbm_to_vmem [thread:$0]  %s258, 512, %s260, [#allocation11], 128, 128, 8
        $region20: #{tpu_custom_call.1} parent=11 // pred_fallthru
          _
        // Predicated region
        $region21: #{tpu_custom_call.1} parent=11 // pred_check
          %p266 = pneg %p153
        $region22: #{tpu_custom_call.1} parent=11 // pred_check_branch
          %268 = sbr.rel (%p266) target = $region24
        $region23: #{tpu_custom_call.1} parent=11 // pred_region
          %270 = vsyncadd [#allocation11], 0
          %s271 = sshll.u32 %s4, 4
          %s272 = int_to_ptr.hbm [resolvable:$true] %s271
          %s273 = sshll.u32 [#allocation12], 4
          %s274 = int_to_ptr.vmem [resolvable:$true] %s273
          %279 = dma.hbm_to_vmem [thread:$0]  %s272, 512, %s274, [#allocation11], 128, 128, 8
        $region24: #{tpu_custom_call.1} parent=11 // pred_fallthru
          _
        // Predicated region
        $region25: #{tpu_custom_call.1} parent=11 // pred_check
          %p280 = pneg %p174
        $region26: #{tpu_custom_call.1} parent=11 // pred_check_branch
          %282 = sbr.rel (%p280) target = $region28
        $region27: #{tpu_custom_call.1} parent=11 // pred_region
          %284 = vsyncadd [#allocation14], 0
          %s285 = sshll.u32 %s5, 4
          %s286 = int_to_ptr.hbm [resolvable:$true] %s285
          %s287 = sshll.u32 [#allocation13], 4
          %s288 = int_to_ptr.vmem [resolvable:$true] %s287
          %293 = dma.hbm_to_vmem [thread:$0]  %s286, 512, %s288, [#allocation14], 128, 128, 8
        $region28: #{tpu_custom_call.1} parent=11 // pred_fallthru
          _
        // Predicated region
        $region29: #{tpu_custom_call.1} parent=11 // pred_check
          %p294 = pneg %p195
        $region30: #{tpu_custom_call.1} parent=11 // pred_check_branch
          %296 = sbr.rel (%p294) target = $region32
        $region31: #{tpu_custom_call.1} parent=11 // pred_region
          _
        $region32: #{tpu_custom_call.1} parent=11 // pred_fallthru
          _
      $region12: #{tpu_custom_call.1} parent=5 // pred_fallthru
        _
      %p297 = scmp.lt.s32.totalorder %s24, 4
      // Predicated region
      $region33: #{tpu_custom_call.1} parent=5 // pred_check
        %p298 = pneg %p297
      $region34: #{tpu_custom_call.1} parent=5 // pred_check_branch
        %300 = sbr.rel (%p298) target = $region36
      $region35: #{tpu_custom_call.1} parent=5 // pred_region
        // Predicated region
        $region37: #{tpu_custom_call.1} parent=35 // pred_check
          %p301 = pneg %p58
        $region38: #{tpu_custom_call.1} parent=35 // pred_check_branch
          %303 = sbr.rel (%p301) target = $region40
        $region39: #{tpu_custom_call.1} parent=35 // pred_region
          %s304 = sand.u32 %s48, 1
          %s305 = scalar_lea.sflag [#allocation5], %s304
          %s306 = sand.u32 %s48, 1
          %s307 = smul.addr %s306, 16
          %s308 = scalar_lea.vmem [#allocation4], %s307
          %s309 = smul.u32 2, %s32
          %311 = vsyncadd %s305, 0
          %s312 = smul.addr %s31, 4
          %s313 = sadd.s32 %s309, %s312
          %s314 = smul.addr %s313, 8
          %s315 = scalar_lea.hbm %s0, %s314
          %s316 = sshll.u32 %s315, 4
          %s317 = int_to_ptr.hbm [resolvable:$true] %s316
          %s318 = sshll.u32 %s308, 4
          %s319 = int_to_ptr.vmem [resolvable:$true] %s318
          %324 = dma.hbm_to_vmem [thread:$0]  %s317, 256, %s319, %s305, 128, 128, 8
        $region40: #{tpu_custom_call.1} parent=35 // pred_fallthru
          _
        // Predicated region
        $region41: #{tpu_custom_call.1} parent=35 // pred_check
          %p325 = pneg %p84
        $region42: #{tpu_custom_call.1} parent=35 // pred_check_branch
          %327 = sbr.rel (%p325) target = $region44
        $region43: #{tpu_custom_call.1} parent=35 // pred_region
          %s328 = sand.u32 %s24, 1
          %s329 = scalar_lea.sflag [#allocation8], %s328
          %s330 = sand.u32 %s74, 1
          %s331 = smul.addr %s330, 16
          %s332 = scalar_lea.vmem [#allocation7], %s331
          %334 = vsyncadd %s329, 0
          %s335 = smul.addr %s31, 2
          %s336 = smul.addr %s335, 8
          %s337 = scalar_lea.hbm %s1, %s336
          %s338 = sshll.u32 %s337, 4
          %s339 = int_to_ptr.hbm [resolvable:$true] %s338
          %s340 = sshll.u32 %s332, 4
          %s341 = int_to_ptr.vmem [resolvable:$true] %s340
          %346 = dma.hbm_to_vmem [thread:$0]  %s339, 256, %s341, %s329, 128, 128, 8
        $region44: #{tpu_custom_call.1} parent=35 // pred_fallthru
          _
      $region36: #{tpu_custom_call.1} parent=5 // pred_fallthru
        _
      %p347 = scmp.le.s32.totalorder 1, %s24
      %p348 = scmp.lt.s32.totalorder %s24, 5
      %p349 = pnand %p347, %p348
      %p350 = pneg %p349
      // Predicated region
      $region45: #{tpu_custom_call.1} parent=5 // pred_check
        _
      $region46: #{tpu_custom_call.1} parent=5 // pred_check_branch
        %352 = sbr.rel (%p349) target = $region48
      $region47: #{tpu_custom_call.1} parent=5 // pred_region
        %s353 = ssub.s32 %s24, 1
        %s354 = sand.u32 %s51, 1
        %s355 = scalar_lea.sflag [#allocation5], %s354
        %s356 = sand.u32 %s51, 1
        %s357 = smul.addr %s356, 16
        %s358 = scalar_lea.vmem [#allocation4], %s357
        // Predicated region
        $region49: #{tpu_custom_call.1} parent=47 // pred_check
          %p359 = pneg %p64
        $region50: #{tpu_custom_call.1} parent=47 // pred_check_branch
          %361 = sbr.rel (%p359) target = $region52
        $region51: #{tpu_custom_call.1} parent=47 // pred_region
          %363 = dma.done %s355, 256
        $region52: #{tpu_custom_call.1} parent=47 // pred_fallthru
          _
        %s364 = sand.u32 %s29, 1
        %s365 = scalar_lea.sflag [#allocation8], %s364
        %s366 = sand.u32 %s77, 1
        %s367 = smul.addr %s366, 16
        %s368 = scalar_lea.vmem [#allocation7], %s367
        // Predicated region
        $region53: #{tpu_custom_call.1} parent=47 // pred_check
          %p369 = pneg %p90
        $region54: #{tpu_custom_call.1} parent=47 // pred_check_branch
          %371 = sbr.rel (%p369) target = $region56
        $region55: #{tpu_custom_call.1} parent=47 // pred_region
          %373 = dma.done %s365, 256
        $region56: #{tpu_custom_call.1} parent=47 // pred_fallthru
          _
        // Predicated region
        $region57: #{tpu_custom_call.1} parent=47 // pred_check
          %p374 = pneg %p111
        $region58: #{tpu_custom_call.1} parent=47 // pred_check_branch
          %376 = sbr.rel (%p374) target = $region60
        $region59: #{tpu_custom_call.1} parent=47 // pred_region
          %378 = dma.done [#allocation8], 512
        $region60: #{tpu_custom_call.1} parent=47 // pred_fallthru
          _
        // Predicated region
        $region61: #{tpu_custom_call.1} parent=47 // pred_check
          %p379 = pneg %p132
        $region62: #{tpu_custom_call.1} parent=47 // pred_check_branch
          %381 = sbr.rel (%p379) target = $region64
        $region63: #{tpu_custom_call.1} parent=47 // pred_region
          %383 = dma.done [#allocation11], 512
        $region64: #{tpu_custom_call.1} parent=47 // pred_fallthru
          _
        // Predicated region
        $region65: #{tpu_custom_call.1} parent=47 // pred_check
          %p384 = pneg %p153
        $region66: #{tpu_custom_call.1} parent=47 // pred_check_branch
          %386 = sbr.rel (%p384) target = $region68
        $region67: #{tpu_custom_call.1} parent=47 // pred_region
          %388 = dma.done [#allocation11], 512
        $region68: #{tpu_custom_call.1} parent=47 // pred_fallthru
          _
        // Predicated region
        $region69: #{tpu_custom_call.1} parent=47 // pred_check
          %p389 = pneg %p174
        $region70: #{tpu_custom_call.1} parent=47 // pred_check_branch
          %391 = sbr.rel (%p389) target = $region72
        $region71: #{tpu_custom_call.1} parent=47 // pred_region
          %393 = dma.done [#allocation14], 512
        $region72: #{tpu_custom_call.1} parent=47 // pred_fallthru
          _
        %s394 = sand.u32 %s51, 1
        %s395 = scalar_lea.sflag [#allocation5], %s394
        %s396 = sand.u32 %s51, 1
        %s397 = smul.addr %s396, 16
        %s398 = scalar_lea.vmem [#allocation4], %s397
        %p399 = pneg %p64
        %p400 = pneg %p61
        %s401 = sand.u32 %s29, 1
        %s402 = scalar_lea.sflag [#allocation8], %s401
        %s403 = sand.u32 %s77, 1
        %s404 = smul.addr %s403, 16
        %s405 = scalar_lea.vmem [#allocation7], %s404
        %p406 = pneg %p90
        %p407 = pneg %p87
        %p408 = pneg %p111
        %p409 = pneg %p108
        %p410 = pneg %p132
        %p411 = pneg %p129
        %p412 = pneg %p153
        %p413 = pneg %p150
        %p414 = pneg %p174
        %p415 = pneg %p171
        %p416 = pneg %p195
        %p417 = pneg %p192
        %p418 = pneg %p223
        %p419 = pneg %p220
        %s420 = sand.u32 %s210, 1
        %s421 = scalar_lea.sflag [#allocation6], %s420
        %s422 = sand.u32 %s210, 1
        %s423 = smul.addr %s422, 16
        %s424 = scalar_lea.vmem [#allocation15], %s423
        %s425 = smul.u32 2, %s34
        %s426 = smul.u32 2, %s34
        %p427 = scmp.eq.s32.totalorder %s34, 0
        // Predicated region
        $region73: #{tpu_custom_call.1} parent=47 // pred_check
          %p428 = pneg %p427
        $region74: #{tpu_custom_call.1} parent=47 // pred_check_branch
          %430 = sbr.rel (%p428) target = $region76
        $region75: #{tpu_custom_call.1} parent=47 // pred_region
          %v431 = vld [vmem:[%s368] sm:$0xff]
          %v432 = vld [vmem:[%s368 + $0x8] sm:$0xff]
          %v433 = vld [vmem:[#allocation10] sm:$0xff]
          %v434 = vld [vmem:[#allocation10 + $0x8] sm:$0xff]
          %v435 = vld [vmem:[#allocation10 + $0x10] sm:$0xff]
          %v436 = vld [vmem:[#allocation10 + $0x18] sm:$0xff]
          %vm437 = vcmask 261120
          %v439 = vsel %vm437, %v431, 0
          %v442 = vsel %vm437, %v432, 0
          %444 = vmatpush.msra.mxu0 0.0
          %445 = vmatpush.msra.mxu0 0.0
          %446 = vmatpush.msra.mxu0 0.0
          %447 = vmatpush.msra.mxu0 0.0
          %448 = vmatpush.msra.mxu0 0.0
          %449 = vmatpush.msra.mxu0 0.0
          %450 = vmatpush.msra.mxu0 0.0
          %451 = vmatpush.msra.mxu0 0.0
          %452 = vmatpush.msra.mxu0 0.0
          %453 = vmatpush.msra.mxu0 0.0
          %454 = vmatpush.msra.mxu0 0.0
          %455 = vmatpush.msra.mxu0 0.0
          %456 = vmatpush.msra.mxu0 %v436
          %457 = vmatpush.msra.mxu0 %v435
          %458 = vmatpush.msra.mxu0 %v434
          %459 = vmatpush.msra.mxu0 %v433
          %460 = vmatmul.f32.gmra.mxu0 %v439
          %v461 = vpop.f32.mrf.mxu0
          %v462 = vadd.f32 0.0, %v461
          %463 = vmatmul.f32.gmra.mxu0 %v442
          %v464 = vpop.f32.mrf.mxu0
          %v465 = vadd.f32 0.0, %v464
          %466 = vdwg.mxu0
          %467 = vst.msk [vmem:[#allocation2] sm:$0xff] %vm437, %v462
          %468 = vst.msk [vmem:[#allocation2 + $0x8] sm:$0xff] %vm437, %v465
          %v469 = vld [vmem:[#allocation12] sm:$0xff]
          %v470 = vld [vmem:[#allocation12 + $0x8] sm:$0xff]
          %v471 = vld [vmem:[#allocation12 + $0x10] sm:$0xff]
          %v472 = vld [vmem:[#allocation12 + $0x18] sm:$0xff]
          %473 = vmatpush.msra.mxu0 0.0
          %474 = vmatpush.msra.mxu0 0.0
          %475 = vmatpush.msra.mxu0 0.0
          %476 = vmatpush.msra.mxu0 0.0
          %477 = vmatpush.msra.mxu0 0.0
          %478 = vmatpush.msra.mxu0 0.0
          %479 = vmatpush.msra.mxu0 0.0
          %480 = vmatpush.msra.mxu0 0.0
          %481 = vmatpush.msra.mxu0 0.0
          %482 = vmatpush.msra.mxu0 0.0
          %483 = vmatpush.msra.mxu0 0.0
          %484 = vmatpush.msra.mxu0 0.0
          %485 = vmatpush.msra.mxu0 %v472
          %486 = vmatpush.msra.mxu0 %v471
          %487 = vmatpush.msra.mxu0 %v470
          %488 = vmatpush.msra.mxu0 %v469
          %489 = vmatmul.f32.gmra.mxu0 %v439
          %v490 = vpop.f32.mrf.mxu0
          %v491 = vadd.f32 0.0, %v490
          %492 = vmatmul.f32.gmra.mxu0 %v442
          %v493 = vpop.f32.mrf.mxu0
          %v494 = vadd.f32 0.0, %v493
          %495 = vdwg.mxu0
          %496 = vst.msk [vmem:[#allocation3] sm:$0xff] %vm437, %v491
          %497 = vst.msk [vmem:[#allocation3 + $0x8] sm:$0xff] %vm437, %v494
        $region76: #{tpu_custom_call.1} parent=47 // pred_fallthru
          _
        %v498 = vld [vmem:[%s358] sm:$0xff]
        %v499 = vld [vmem:[%s358 + $0x8] sm:$0xff]
        %v500 = vld [vmem:[#allocation9] sm:$0xff]
        %v501 = vld [vmem:[#allocation9 + $0x8] sm:$0xff]
        %v502 = vld [vmem:[#allocation9 + $0x10] sm:$0xff]
        %v503 = vld [vmem:[#allocation9 + $0x18] sm:$0xff]
        %vm504 = vcmask 261120
        %v506 = vsel %vm504, %v498, 0
        %v509 = vsel %vm504, %v499, 0
        %511 = vmatpush.msra.mxu0 0.0
        %512 = vmatpush.msra.mxu0 0.0
        %513 = vmatpush.msra.mxu0 0.0
        %514 = vmatpush.msra.mxu0 0.0
        %515 = vmatpush.msra.mxu0 0.0
        %516 = vmatpush.msra.mxu0 0.0
        %517 = vmatpush.msra.mxu0 0.0
        %518 = vmatpush.msra.mxu0 0.0
        %519 = vmatpush.msra.mxu0 0.0
        %520 = vmatpush.msra.mxu0 0.0
        %521 = vmatpush.msra.mxu0 0.0
        %522 = vmatpush.msra.mxu0 0.0
        %523 = vmatpush.msra.mxu0 %v503
        %524 = vmatpush.msra.mxu0 %v502
        %525 = vmatpush.msra.mxu0 %v501
        %526 = vmatpush.msra.mxu0 %v500
        %527 = vmatmul.f32.gmra.mxu0 %v506
        %v528 = vpop.f32.mrf.mxu0
        %v529 = vadd.f32 0.0, %v528
        %530 = vmatmul.f32.gmra.mxu0 %v509
        %v531 = vpop.f32.mrf.mxu0
        %v532 = vadd.f32 0.0, %v531
        %533 = vdwg.mxu0
        %v534 = vmul.f32 %v529, 0.35355338
        %v535 = vmul.f32 %v532, 0.35355338
        %v536 = vld [vmem:[#allocation2] sm:$0xff]
        %v537 = vld [vmem:[#allocation2 + $0x8] sm:$0xff]
        %v538 = vld [vmem:[#allocation3] sm:$0xff]
        %v539 = vld [vmem:[#allocation3 + $0x8] sm:$0xff]
        %vm540 = vcmask 64512
        %v542 = vsel %vm540, %v534, 0
        %v545 = vsel %vm540, %v535, 0
        %v548 = vsel %vm540, %v536, 0
        %v551 = vsel %vm540, %v537, 0
        %553 = vmatpush.xpose.msra.mxu0 0.0
        %554 = vmatpush.xpose.msra.mxu0 0.0
        %555 = vmatpush.xpose.msra.mxu0 0.0
        %556 = vmatpush.xpose.msra.mxu0 0.0
        %557 = vmatpush.xpose.msra.mxu0 0.0
        %558 = vmatpush.xpose.msra.mxu0 0.0
        %559 = vmatpush.xpose.msra.mxu0 0.0
        %560 = vmatpush.xpose.msra.mxu0 0.0
        %561 = vmatpush.xpose.msra.mxu0 0.0
        %562 = vmatpush.xpose.msra.mxu0 0.0
        %563 = vmatpush.xpose.msra.mxu0 0.0
        %564 = vmatpush.xpose.msra.mxu0 0.0
        %565 = vmatpush.xpose.msra.mxu0 0.0
        %566 = vmatpush.xpose.msra.mxu0 0.0
        %567 = vmatpush.xpose.msra.mxu0 %v551
        %568 = vmatpush.xpose.msra.mxu0 %v548
        %569 = vmatmul.f32.gmra.mxu0 %v542
        %v570 = vpop.f32.mrf.mxu0
        %v571 = vadd.f32 0.0, %v570
        %572 = vmatmul.f32.gmra.mxu0 %v545
        %v573 = vpop.f32.mrf.mxu0
        %v574 = vadd.f32 0.0, %v573
        %575 = vdwg.mxu0
        %vm576 = vcmask 130048
        %v577 = vsel %vm576, %v571, -inf
        %578 = vmax.xlane.f32.xlu0 %v577
        %v579 = vpop.xlane.xlu0 %578
        %v580 = vsel %vm576, %v574, -inf
        %581 = vmax.xlane.f32.xlu0 %v580
        %v582 = vpop.xlane.xlu0 %581
        %v583 = vsub.f32 %v571, %v579
        %v584 = vsub.f32 %v574, %v582
        %v585 = vmul.f32 %v583, 1.442695
        %v586 = vpow.pop %v585
        %v587 = vmul.f32 %v584, 1.442695
        %v588 = vpow.pop %v587
        %v589 = vsel %vm576, %v586, 0.0
        %590 = vadd.xlane.f32.xlu0 %v589
        %v591 = vpop.xlane.xlu0 %590
        %v592 = vsel %vm576, %v588, 0.0
        %593 = vadd.xlane.f32.xlu0 %v592
        %v594 = vpop.xlane.xlu0 %593
        %v595 = vrcp.pop %v591
        %v596 = vrcp.pop %v594
        %v597 = vmul.f32 %v586, %v595
        %v598 = vmul.f32 %v588, %v596
        %v600 = vsel %vm576, %v597, 0
        %v603 = vsel %vm576, %v598, 0
        %605 = vmatpush.msra.mxu0 0.0
        %606 = vmatpush.msra.mxu0 0.0
        %607 = vmatpush.msra.mxu0 0.0
        %608 = vmatpush.msra.mxu0 0.0
        %609 = vmatpush.msra.mxu0 0.0
        %610 = vmatpush.msra.mxu0 0.0
        %611 = vmatpush.msra.mxu0 0.0
        %612 = vmatpush.msra.mxu0 0.0
        %613 = vmatpush.msra.mxu0 0.0
        %614 = vmatpush.msra.mxu0 0.0
        %615 = vmatpush.msra.mxu0 0.0
        %616 = vmatpush.msra.mxu0 0.0
        %617 = vmatpush.msra.mxu0 0.0
        %618 = vmatpush.msra.mxu0 0.0
        %619 = vmatpush.msra.mxu0 %v539
        %620 = vmatpush.msra.mxu0 %v538
        %621 = vmatmul.f32.gmra.mxu0 %v600
        %v622 = vpop.f32.mrf.mxu0
        %v623 = vadd.f32 0.0, %v622
        %624 = vmatmul.f32.gmra.mxu0 %v603
        %v625 = vpop.f32.mrf.mxu0
        %v626 = vadd.f32 0.0, %v625
        %627 = vdwg.mxu0
        %v628 = vld [vmem:[#allocation13] sm:$0xff]
        %629 = vrot.lane.b32.xlu0 %v534, 120
        %v630 = vpop.permute.xlu0 %629
        %631 = vrot.lane.b32.xlu0 %v535, 120
        %v632 = vpop.permute.xlu0 %631
        %633 = vrot.lane.b32.xlu0 %v536, 120
        %v634 = vpop.permute.xlu0 %633
        %635 = vrot.lane.b32.xlu0 %v537, 120
        %v636 = vpop.permute.xlu0 %635
        %v637 = vsel %vm540, %v630, 0
        %v639 = vsel %vm540, %v632, 0
        %v641 = vsel %vm540, %v634, 0
        %v643 = vsel %vm540, %v636, 0
        %645 = vmatpush.xpose.msra.mxu0 0.0
        %646 = vmatpush.xpose.msra.mxu0 0.0
        %647 = vmatpush.xpose.msra.mxu0 0.0
        %648 = vmatpush.xpose.msra.mxu0 0.0
        %649 = vmatpush.xpose.msra.mxu0 0.0
        %650 = vmatpush.xpose.msra.mxu0 0.0
        %651 = vmatpush.xpose.msra.mxu0 0.0
        %652 = vmatpush.xpose.msra.mxu0 0.0
        %653 = vmatpush.xpose.msra.mxu0 0.0
        %654 = vmatpush.xpose.msra.mxu0 0.0
        %655 = vmatpush.xpose.msra.mxu0 0.0
        %656 = vmatpush.xpose.msra.mxu0 0.0
        %657 = vmatpush.xpose.msra.mxu0 0.0
        %658 = vmatpush.xpose.msra.mxu0 0.0
        %659 = vmatpush.xpose.msra.mxu0 %v643
        %660 = vmatpush.xpose.msra.mxu0 %v641
        %661 = vmatmul.f32.gmra.mxu0 %v637
        %v662 = vpop.f32.mrf.mxu0
        %v663 = vadd.f32 0.0, %v662
        %664 = vmatmul.f32.gmra.mxu0 %v639
        %v665 = vpop.f32.mrf.mxu0
        %v666 = vadd.f32 0.0, %v665
        %667 = vdwg.mxu0
        %v668 = vsel %vm576, %v663, -inf
        %669 = vmax.xlane.f32.xlu0 %v668
        %v670 = vpop.xlane.xlu0 %669
        %v671 = vsel %vm576, %v666, -inf
        %672 = vmax.xlane.f32.xlu0 %v671
        %v673 = vpop.xlane.xlu0 %672
        %v674 = vsub.f32 %v663, %v670
        %v675 = vsub.f32 %v666, %v673
        %v676 = vmul.f32 %v674, 1.442695
        %v677 = vpow.pop %v676
        %v678 = vmul.f32 %v675, 1.442695
        %v679 = vpow.pop %v678
        %v680 = vsel %vm576, %v677, 0.0
        %681 = vadd.xlane.f32.xlu0 %v680
        %v682 = vpop.xlane.xlu0 %681
        %v683 = vsel %vm576, %v679, 0.0
        %684 = vadd.xlane.f32.xlu0 %v683
        %v685 = vpop.xlane.xlu0 %684
        %v686 = vrcp.pop %v682
        %v687 = vrcp.pop %v685
        %v688 = vmul.f32 %v677, %v686
        %v689 = vmul.f32 %v679, %v687
        %692 = vrot.lane.b32.xlu0 %v538, 120
        %v693 = vpop.permute.xlu0 %692
        %694 = vrot.lane.b32.xlu0 %v539, 120
        %v695 = vpop.permute.xlu0 %694
        %v699 = vsel %vm576, %v688, 0
        %v702 = vsel %vm576, %v689, 0
        %704 = vmatpush.msra.mxu0 0.0
        %705 = vmatpush.msra.mxu0 0.0
        %706 = vmatpush.msra.mxu0 0.0
        %707 = vmatpush.msra.mxu0 0.0
        %708 = vmatpush.msra.mxu0 0.0
        %709 = vmatpush.msra.mxu0 0.0
        %710 = vmatpush.msra.mxu0 0.0
        %711 = vmatpush.msra.mxu0 0.0
        %712 = vmatpush.msra.mxu0 0.0
        %713 = vmatpush.msra.mxu0 0.0
        %714 = vmatpush.msra.mxu0 0.0
        %715 = vmatpush.msra.mxu0 0.0
        %716 = vmatpush.msra.mxu0 0.0
        %717 = vmatpush.msra.mxu0 0.0
        %718 = vmatpush.msra.mxu0 %v695
        %719 = vmatpush.msra.mxu0 %v693
        %720 = vmatmul.f32.gmra.mxu0 %v699
        %v721 = vpop.f32.mrf.mxu0
        %v722 = vadd.f32 0.0, %v721
        %723 = vmatmul.f32.gmra.mxu0 %v702
        %v724 = vpop.f32.mrf.mxu0
        %v725 = vadd.f32 0.0, %v724
        %726 = vdwg.mxu0
        %v727 = vld [vmem:[#allocation13 + $0x8] sm:$0xff]
        %v729 = vsel %vm540, %v722, 0
        %v732 = vsel %vm540, %v725, 0
        %734 = vmatpush.msra.mxu0 0.0
        %735 = vmatpush.msra.mxu0 0.0
        %736 = vmatpush.msra.mxu0 0.0
        %737 = vmatpush.msra.mxu0 0.0
        %738 = vmatpush.msra.mxu0 0.0
        %739 = vmatpush.msra.mxu0 0.0
        %740 = vmatpush.msra.mxu0 0.0
        %741 = vmatpush.msra.mxu0 0.0
        %742 = vmatpush.msra.mxu0 0.0
        %743 = vmatpush.msra.mxu0 0.0
        %744 = vmatpush.msra.mxu0 0.0
        %745 = vmatpush.msra.mxu0 0.0
        %746 = vmatpush.msra.mxu0 0.0
        %747 = vmatpush.msra.mxu0 0.0
        %748 = vmatpush.msra.mxu0 0.0
        %749 = vmatpush.msra.mxu0 %v727
        %750 = vmatmul.f32.gmra.mxu0 %v729
        %v751 = vpop.f32.mrf.mxu0
        %v752 = vadd.f32 0.0, %v751
        %753 = vmatmul.f32.gmra.mxu0 %v732
        %v754 = vpop.f32.mrf.mxu0
        %v755 = vadd.f32 0.0, %v754
        %756 = vdwg.mxu0
        %v758 = vsel %vm540, %v623, 0
        %v761 = vsel %vm540, %v626, 0
        %763 = vmatpush.msra.mxu0 0.0
        %764 = vmatpush.msra.mxu0 0.0
        %765 = vmatpush.msra.mxu0 0.0
        %766 = vmatpush.msra.mxu0 0.0
        %767 = vmatpush.msra.mxu0 0.0
        %768 = vmatpush.msra.mxu0 0.0
        %769 = vmatpush.msra.mxu0 0.0
        %770 = vmatpush.msra.mxu0 0.0
        %771 = vmatpush.msra.mxu0 0.0
        %772 = vmatpush.msra.mxu0 0.0
        %773 = vmatpush.msra.mxu0 0.0
        %774 = vmatpush.msra.mxu0 0.0
        %775 = vmatpush.msra.mxu0 0.0
        %776 = vmatpush.msra.mxu0 0.0
        %777 = vmatpush.msra.mxu0 0.0
        %778 = vmatpush.msra.mxu0 %v628
        %779 = vmatmul.f32.gmra.mxu0 %v758
        %v780 = vpop.f32.mrf.mxu0
        %v781 = vadd.f32 %v752, %v780
        %782 = vmatmul.f32.gmra.mxu0 %v761
        %v783 = vpop.f32.mrf.mxu0
        %v784 = vadd.f32 %v755, %v783
        %785 = vdwg.mxu0
        %786 = vrot.lane.b32.xlu0 %v534, 112
        %v787 = vpop.permute.xlu0 %786
        %788 = vrot.lane.b32.xlu0 %v535, 112
        %v789 = vpop.permute.xlu0 %788
        %790 = vrot.lane.b32.xlu0 %v536, 112
        %v791 = vpop.permute.xlu0 %790
        %792 = vrot.lane.b32.xlu0 %v537, 112
        %v793 = vpop.permute.xlu0 %792
        %v794 = vsel %vm540, %v787, 0
        %v796 = vsel %vm540, %v789, 0
        %v798 = vsel %vm540, %v791, 0
        %v800 = vsel %vm540, %v793, 0
        %802 = vmatpush.xpose.msra.mxu0 0.0
        %803 = vmatpush.xpose.msra.mxu0 0.0
        %804 = vmatpush.xpose.msra.mxu0 0.0
        %805 = vmatpush.xpose.msra.mxu0 0.0
        %806 = vmatpush.xpose.msra.mxu0 0.0
        %807 = vmatpush.xpose.msra.mxu0 0.0
        %808 = vmatpush.xpose.msra.mxu0 0.0
        %809 = vmatpush.xpose.msra.mxu0 0.0
        %810 = vmatpush.xpose.msra.mxu0 0.0
        %811 = vmatpush.xpose.msra.mxu0 0.0
        %812 = vmatpush.xpose.msra.mxu0 0.0
        %813 = vmatpush.xpose.msra.mxu0 0.0
        %814 = vmatpush.xpose.msra.mxu0 0.0
        %815 = vmatpush.xpose.msra.mxu0 0.0
        %816 = vmatpush.xpose.msra.mxu0 %v800
        %817 = vmatpush.xpose.msra.mxu0 %v798
        %818 = vmatmul.f32.gmra.mxu0 %v794
        %v819 = vpop.f32.mrf.mxu0
        %v820 = vadd.f32 0.0, %v819
        %821 = vmatmul.f32.gmra.mxu0 %v796
        %v822 = vpop.f32.mrf.mxu0
        %v823 = vadd.f32 0.0, %v822
        %824 = vdwg.mxu0
        %v825 = vsel %vm576, %v820, -inf
        %826 = vmax.xlane.f32.xlu0 %v825
        %v827 = vpop.xlane.xlu0 %826
        %v828 = vsel %vm576, %v823, -inf
        %829 = vmax.xlane.f32.xlu0 %v828
        %v830 = vpop.xlane.xlu0 %829
        %v831 = vsub.f32 %v820, %v827
        %v832 = vsub.f32 %v823, %v830
        %v833 = vmul.f32 %v831, 1.442695
        %v834 = vpow.pop %v833
        %v835 = vmul.f32 %v832, 1.442695
        %v836 = vpow.pop %v835
        %v837 = vsel %vm576, %v834, 0.0
        %838 = vadd.xlane.f32.xlu0 %v837
        %v839 = vpop.xlane.xlu0 %838
        %v840 = vsel %vm576, %v836, 0.0
        %841 = vadd.xlane.f32.xlu0 %v840
        %v842 = vpop.xlane.xlu0 %841
        %v843 = vrcp.pop %v839
        %v844 = vrcp.pop %v842
        %v845 = vmul.f32 %v834, %v843
        %v846 = vmul.f32 %v836, %v844
        %847 = vrot.lane.b32.xlu0 %v538, 112
        %v848 = vpop.permute.xlu0 %847
        %849 = vrot.lane.b32.xlu0 %v539, 112
        %v850 = vpop.permute.xlu0 %849
        %v854 = vsel %vm576, %v845, 0
        %v857 = vsel %vm576, %v846, 0
        %859 = vmatpush.msra.mxu0 0.0
        %860 = vmatpush.msra.mxu0 0.0
        %861 = vmatpush.msra.mxu0 0.0
        %862 = vmatpush.msra.mxu0 0.0
        %863 = vmatpush.msra.mxu0 0.0
        %864 = vmatpush.msra.mxu0 0.0
        %865 = vmatpush.msra.mxu0 0.0
        %866 = vmatpush.msra.mxu0 0.0
        %867 = vmatpush.msra.mxu0 0.0
        %868 = vmatpush.msra.mxu0 0.0
        %869 = vmatpush.msra.mxu0 0.0
        %870 = vmatpush.msra.mxu0 0.0
        %871 = vmatpush.msra.mxu0 0.0
        %872 = vmatpush.msra.mxu0 0.0
        %873 = vmatpush.msra.mxu0 %v850
        %874 = vmatpush.msra.mxu0 %v848
        %875 = vmatmul.f32.gmra.mxu0 %v854
        %v876 = vpop.f32.mrf.mxu0
        %v877 = vadd.f32 0.0, %v876
        %878 = vmatmul.f32.gmra.mxu0 %v857
        %v879 = vpop.f32.mrf.mxu0
        %v880 = vadd.f32 0.0, %v879
        %881 = vdwg.mxu0
        %v882 = vld [vmem:[#allocation13 + $0x10] sm:$0xff]
        %v884 = vsel %vm540, %v877, 0
        %v887 = vsel %vm540, %v880, 0
        %889 = vmatpush.msra.mxu0 0.0
        %890 = vmatpush.msra.mxu0 0.0
        %891 = vmatpush.msra.mxu0 0.0
        %892 = vmatpush.msra.mxu0 0.0
        %893 = vmatpush.msra.mxu0 0.0
        %894 = vmatpush.msra.mxu0 0.0
        %895 = vmatpush.msra.mxu0 0.0
        %896 = vmatpush.msra.mxu0 0.0
        %897 = vmatpush.msra.mxu0 0.0
        %898 = vmatpush.msra.mxu0 0.0
        %899 = vmatpush.msra.mxu0 0.0
        %900 = vmatpush.msra.mxu0 0.0
        %901 = vmatpush.msra.mxu0 0.0
        %902 = vmatpush.msra.mxu0 0.0
        %903 = vmatpush.msra.mxu0 0.0
        %904 = vmatpush.msra.mxu0 %v882
        %905 = vmatmul.f32.gmra.mxu0 %v884
        %v906 = vpop.f32.mrf.mxu0
        %v907 = vadd.f32 0.0, %v906
        %908 = vmatmul.f32.gmra.mxu0 %v887
        %v909 = vpop.f32.mrf.mxu0
        %v910 = vadd.f32 0.0, %v909
        %911 = vdwg.mxu0
        %v912 = vadd.f32 %v781, %v907
        %v913 = vadd.f32 %v784, %v910
        %914 = vrot.lane.b32.xlu0 %v534, 104
        %v915 = vpop.permute.xlu0 %914
        %916 = vrot.lane.b32.xlu0 %v535, 104
        %v917 = vpop.permute.xlu0 %916
        %918 = vrot.lane.b32.xlu0 %v536, 104
        %v919 = vpop.permute.xlu0 %918
        %920 = vrot.lane.b32.xlu0 %v537, 104
        %v921 = vpop.permute.xlu0 %920
        %v922 = vsel %vm540, %v915, 0
        %v924 = vsel %vm540, %v917, 0
        %v926 = vsel %vm540, %v919, 0
        %v928 = vsel %vm540, %v921, 0
        %930 = vmatpush.xpose.msra.mxu0 0.0
        %931 = vmatpush.xpose.msra.mxu0 0.0
        %932 = vmatpush.xpose.msra.mxu0 0.0
        %933 = vmatpush.xpose.msra.mxu0 0.0
        %934 = vmatpush.xpose.msra.mxu0 0.0
        %935 = vmatpush.xpose.msra.mxu0 0.0
        %936 = vmatpush.xpose.msra.mxu0 0.0
        %937 = vmatpush.xpose.msra.mxu0 0.0
        %938 = vmatpush.xpose.msra.mxu0 0.0
        %939 = vmatpush.xpose.msra.mxu0 0.0
        %940 = vmatpush.xpose.msra.mxu0 0.0
        %941 = vmatpush.xpose.msra.mxu0 0.0
        %942 = vmatpush.xpose.msra.mxu0 0.0
        %943 = vmatpush.xpose.msra.mxu0 0.0
        %944 = vmatpush.xpose.msra.mxu0 %v928
        %945 = vmatpush.xpose.msra.mxu0 %v926
        %946 = vmatmul.f32.gmra.mxu0 %v922
        %v947 = vpop.f32.mrf.mxu0
        %v948 = vadd.f32 0.0, %v947
        %949 = vmatmul.f32.gmra.mxu0 %v924
        %v950 = vpop.f32.mrf.mxu0
        %v951 = vadd.f32 0.0, %v950
        %952 = vdwg.mxu0
        %v953 = vsel %vm576, %v948, -inf
        %954 = vmax.xlane.f32.xlu0 %v953
        %v955 = vpop.xlane.xlu0 %954
        %v956 = vsel %vm576, %v951, -inf
        %957 = vmax.xlane.f32.xlu0 %v956
        %v958 = vpop.xlane.xlu0 %957
        %v959 = vsub.f32 %v948, %v955
        %v960 = vsub.f32 %v951, %v958
        %v961 = vmul.f32 %v959, 1.442695
        %v962 = vpow.pop %v961
        %v963 = vmul.f32 %v960, 1.442695
        %v964 = vpow.pop %v963
        %v965 = vsel %vm576, %v962, 0.0
        %966 = vadd.xlane.f32.xlu0 %v965
        %v967 = vpop.xlane.xlu0 %966
        %v968 = vsel %vm576, %v964, 0.0
        %969 = vadd.xlane.f32.xlu0 %v968
        %v970 = vpop.xlane.xlu0 %969
        %v971 = vrcp.pop %v967
        %v972 = vrcp.pop %v970
        %v973 = vmul.f32 %v962, %v971
        %v974 = vmul.f32 %v964, %v972
        %975 = vrot.lane.b32.xlu0 %v538, 104
        %v976 = vpop.permute.xlu0 %975
        %977 = vrot.lane.b32.xlu0 %v539, 104
        %v978 = vpop.permute.xlu0 %977
        %v982 = vsel %vm576, %v973, 0
        %v985 = vsel %vm576, %v974, 0
        %987 = vmatpush.msra.mxu0 0.0
        %988 = vmatpush.msra.mxu0 0.0
        %989 = vmatpush.msra.mxu0 0.0
        %990 = vmatpush.msra.mxu0 0.0
        %991 = vmatpush.msra.mxu0 0.0
        %992 = vmatpush.msra.mxu0 0.0
        %993 = vmatpush.msra.mxu0 0.0
        %994 = vmatpush.msra.mxu0 0.0
        %995 = vmatpush.msra.mxu0 0.0
        %996 = vmatpush.msra.mxu0 0.0
        %997 = vmatpush.msra.mxu0 0.0
        %998 = vmatpush.msra.mxu0 0.0
        %999 = vmatpush.msra.mxu0 0.0
        %1000 = vmatpush.msra.mxu0 0.0
        %1001 = vmatpush.msra.mxu0 %v978
        %1002 = vmatpush.msra.mxu0 %v976
        %1003 = vmatmul.f32.gmra.mxu0 %v982
        %v1004 = vpop.f32.mrf.mxu0
        %v1005 = vadd.f32 0.0, %v1004
        %1006 = vmatmul.f32.gmra.mxu0 %v985
        %v1007 = vpop.f32.mrf.mxu0
        %v1008 = vadd.f32 0.0, %v1007
        %1009 = vdwg.mxu0
        %v1010 = vld [vmem:[#allocation13 + $0x18] sm:$0xff]
        %v1012 = vsel %vm540, %v1005, 0
        %v1015 = vsel %vm540, %v1008, 0
        %1017 = vmatpush.msra.mxu0 0.0
        %1018 = vmatpush.msra.mxu0 0.0
        %1019 = vmatpush.msra.mxu0 0.0
        %1020 = vmatpush.msra.mxu0 0.0
        %1021 = vmatpush.msra.mxu0 0.0
        %1022 = vmatpush.msra.mxu0 0.0
        %1023 = vmatpush.msra.mxu0 0.0
        %1024 = vmatpush.msra.mxu0 0.0
        %1025 = vmatpush.msra.mxu0 0.0
        %1026 = vmatpush.msra.mxu0 0.0
        %1027 = vmatpush.msra.mxu0 0.0
        %1028 = vmatpush.msra.mxu0 0.0
        %1029 = vmatpush.msra.mxu0 0.0
        %1030 = vmatpush.msra.mxu0 0.0
        %1031 = vmatpush.msra.mxu0 0.0
        %1032 = vmatpush.msra.mxu0 %v1010
        %1033 = vmatmul.f32.gmra.mxu0 %v1012
        %v1034 = vpop.f32.mrf.mxu0
        %v1035 = vadd.f32 0.0, %v1034
        %1036 = vmatmul.f32.gmra.mxu0 %v1015
        %v1037 = vpop.f32.mrf.mxu0
        %v1038 = vadd.f32 0.0, %v1037
        %1039 = vdwg.mxu0
        %v1040 = vadd.f32 %v912, %v1035
        %v1041 = vadd.f32 %v913, %v1038
        %v1042 = vld [vmem:[%s6] sm:$0x1]
        %v1044 = vperm.slane %v1042, 0
        %v1046 = vadd.f32 %v1040, %v1044
        %v1047 = vadd.f32 %v1041, %v1044
        %1048 = vst.msk [vmem:[%s424] sm:$0xff] %vm504, %v1046
        %1049 = vst.msk [vmem:[%s424 + $0x8] sm:$0xff] %vm504, %v1047
        %s1050 = sand.u32 %s210, 1
        %s1051 = scalar_lea.sflag [#allocation6], %s1050
        %s1052 = sand.u32 %s210, 1
        %s1053 = smul.addr %s1052, 16
        %s1054 = scalar_lea.vmem [#allocation15], %s1053
        // Predicated region
        $region77: #{tpu_custom_call.1} parent=47 // pred_check
          %p1055 = pneg %p220
        $region78: #{tpu_custom_call.1} parent=47 // pred_check_branch
          %1057 = sbr.rel (%p1055) target = $region80
        $region79: #{tpu_custom_call.1} parent=47 // pred_region
          %s1058 = smul.u32 2, %s34
          %1060 = vsyncadd %s1051, 0
          %s1061 = smul.addr %s33, 4
          %s1062 = sadd.s32 %s1058, %s1061
          %s1063 = smul.addr %s1062, 8
          %s1064 = scalar_lea.hbm %s7, %s1063
          %s1065 = sshll.u32 %s1054, 4
          %s1066 = int_to_ptr.vmem [resolvable:$true] %s1065
          %s1067 = sshll.u32 %s1064, 4
          %s1068 = int_to_ptr.hbm [resolvable:$true] %s1067
          %1073 = dma.vmem_to_hbm [thread:$0]  %s1066, 256, %s1068, %s1051, 128, 128, 8
        $region80: #{tpu_custom_call.1} parent=47 // pred_fallthru
          _
      $region48: #{tpu_custom_call.1} parent=5 // pred_fallthru
        _
      %p1074 = scmp.le.s32.totalorder 2, %s24
      // Predicated region
      $region81: #{tpu_custom_call.1} parent=5 // pred_check
        %p1075 = pneg %p1074
      $region82: #{tpu_custom_call.1} parent=5 // pred_check_branch
        %1077 = sbr.rel (%p1075) target = $region84
      $region83: #{tpu_custom_call.1} parent=5 // pred_region
        %s1078 = ssub.s32 %s24, 2
        // Predicated region
        $region85: #{tpu_custom_call.1} parent=83 // pred_check
          %p1079 = pneg %p226
        $region86: #{tpu_custom_call.1} parent=83 // pred_check_branch
          %1081 = sbr.rel (%p1079) target = $region88
        $region87: #{tpu_custom_call.1} parent=83 // pred_region
          %s1082 = sand.u32 %s211, 1
          %s1083 = scalar_lea.sflag [#allocation6], %s1082
          %s1084 = sand.u32 %s211, 1
          %s1085 = smul.addr %s1084, 16
          %s1086 = scalar_lea.vmem [#allocation15], %s1085
          %1088 = dma.done %s1083, 256
        $region88: #{tpu_custom_call.1} parent=83 // pred_fallthru
          _
      $region84: #{tpu_custom_call.1} parent=5 // pred_fallthru
        _
    $region6: #{tpu_custom_call.1} parent=1 // loop_footer
      %s28 = sadd.s32 1, %s24
    $region7: #{tpu_custom_call.1} parent=1 // loop_footer_branch
      %23 = sbr.rel target = $region3
    $region8: #{tpu_custom_call.1} parent=1 // loop_exit
      _
    %1089 = vsyncpa [#allocation5], 1
    %s1090 = scalar_lea.sflag [#allocation5], 1
    %1091 = vsyncpa %s1090, 1
    %1092 = vsyncpa [#allocation8], 1
    %s1093 = scalar_lea.sflag [#allocation8], 1
    %1094 = vsyncpa %s1093, 1
    %1095 = vsyncpa [#allocation11], 1
    %1096 = vsyncpa [#allocation14], 1
    %1097 = vsyncpa [#allocation6], 1
    %s1098 = scalar_lea.sflag [#allocation6], 1
    %1099 = vsyncpa %s1098, 1

</llo_original>
